<compile_context>
chip_gen: v6e
topology: v6e:2x2x1
jax: 0.10.0
libtpu: 0.0.40
codegen_flags: <defaults>
</compile_context>

<pallas_src>
import functools

import jax
import jax.numpy as jnp
from jax.experimental import pallas as pl
from jax.experimental.pallas import tpu as pltpu


# ----------------------------------------------------------------------------
# Kernel
# ----------------------------------------------------------------------------
def simple_lstm_kernel(
    x_ref,      # (TL, Bb, Dinp)  bf16  time-major input chunk
    wf_ref,     # (Dinp, 4*Hp)    bf16  folded fc1 @ W_ih (gate-block padded)
    bias_ref,   # (1, 4*Hp)       f32   folded bias  b1@Wih + b_ih + b_hh
    whh_ref,    # (Hp, 4*Hp)      bf16  recurrent weights (gate-block padded)
    w2_ref,     # (Hp, Op)        bf16  fc2 weight (padded)
    b2_ref,     # (1, Op)         f32   fc2 bias (padded)
    out_ref,    # (TL, Bb, Op)    f32   time-major output chunk (lane dense)
    gx_scr,     # (TL, Bb, 4*Hp)  f32   precomputed input-side gates
    h_scr,      # (TL+1, Bb, Hp)  bf16  hidden slab; slot 0 = carry-in
    c_scr,      # (Bb, Hp)        f32   cell state (persists across grid steps)
):
    TL, Bb, Dinp = x_ref.shape
    Hp = c_scr.shape[-1]
    Op = out_ref.shape[-1]

    t_id = pl.program_id(1)   # time-chunk index (axis 1 of the (batch, time) grid)

    # init_hidden(): zeros at the first time chunk of every batch block.
    @pl.when(t_id == 0)
    def _():
        h_scr[0] = jnp.zeros((Bb, Hp), dtype=h_scr.dtype)
        c_scr[...] = jnp.zeros((Bb, Hp), dtype=c_scr.dtype)

    # carry h from the previous chunk (last slot of the persistent slab).
    @pl.when(t_id != 0)
    def _():
        h_scr[0] = h_scr[TL]

    # --- Hoisted input projection: fc1 folded into W_ih, one bf16 MXU matmul ---
    x2 = x_ref[...].reshape(TL * Bb, Dinp)
    gx = jnp.dot(x2, wf_ref[...], preferred_element_type=jnp.float32) \
        + bias_ref[...]
    gx_scr[...] = gx.reshape(TL, Bb, 4 * Hp)

    whh = whh_ref[...]  # hoisted load, reused every step

    # --- Serial recurrence: only h @ W_hh + elementwise on the critical path ---
    def step(t, carry):
        h_prev = h_scr[t]                                   # bf16 (Bb, Hp)
        gates = gx_scr[t] + jnp.dot(h_prev, whh,
                                    preferred_element_type=jnp.float32)
        # PyTorch gate order: i, f, g, o — slices are 128-lane aligned.
        # sigmoid(x) = 0.5*(1 + tanh(0.5*x)): one EUP op per gate.
        i_g = 0.5 * (1.0 + jnp.tanh(0.5 * gates[:, 0 * Hp:1 * Hp]))
        f_g = 0.5 * (1.0 + jnp.tanh(0.5 * gates[:, 1 * Hp:2 * Hp]))
        g_g = jnp.tanh(gates[:, 2 * Hp:3 * Hp])
        o_g = 0.5 * (1.0 + jnp.tanh(0.5 * gates[:, 3 * Hp:4 * Hp]))

        c_new = f_g * c_scr[...] + i_g * g_g
        c_scr[...] = c_new
        # single hidden store per step (lane-dense bf16 slab)
        h_scr[t + 1] = (o_g * jnp.tanh(c_new)).astype(h_scr.dtype)
        return carry

    if TL <= 32 and Hp <= 512:
        unroll = True
    else:
        unroll = max(2, min(8, 1024 // Hp))   # cap unroll vs vreg pressure
    jax.lax.fori_loop(0, TL, step, 0, unroll=unroll)

    # --- Hoisted fc2 (dropout = identity in eval mode) -----------------------
    h2 = h_scr[pl.ds(1, TL)].reshape(TL * Bb, Hp)           # bf16 LHS
    y = jnp.dot(h2, w2_ref[...], preferred_element_type=jnp.float32) \
        + b2_ref[...]
    out_ref[...] = y.reshape(TL, Bb, Op).astype(out_ref.dtype)


# ----------------------------------------------------------------------------
# Wrapper
# ----------------------------------------------------------------------------
def _round_up(n, m):
    return ((n + m - 1) // m) * m


def _pad_to(a, shape):
    return jnp.pad(a, [(0, s - d) for d, s in zip(a.shape, shape)])


def _pad_gate_cols(a, H, Hp):
    """(..., 4H) -> (..., 4Hp): gate block k goes to [k*Hp : k*Hp+H], rest zero."""
    parts = []
    for k in range(4):
        blk = a[..., k * H:(k + 1) * H]
        parts.append(jnp.pad(blk, [(0, 0)] * (a.ndim - 1) + [(0, Hp - H)]))
    return jnp.concatenate(parts, axis=-1)


def _pick_time_chunk(L, Bb, Dinp, Hp, Op, budget_bytes, cap):
    """Largest TL whose per-chunk VMEM footprint fits the budget."""
    per_t = (Bb * 4 * Hp * 4          # gx_scr (f32)
             + Bb * Hp * 2            # hidden slab (bf16)
             + 2 * Bb * Dinp * 2      # x block, double-buffered, bf16
             + 2 * Bb * Op * 4)       # out block, double-buffered, f32
    fixed = (Dinp * 4 * Hp * 2        # wf  (bf16, single-buffered)
             + Hp * 4 * Hp * 2        # whh (bf16, single-buffered)
             + Hp * Op * 2            # w2  (bf16, single-buffered)
             + 4 * Hp * 4 + Op * 4    # biases (f32)
             + Bb * Hp * (2 + 4))     # h carry slot + c state
    tl = (budget_bytes - fixed) // per_t
    return int(max(1, min(tl, cap, L)))


@functools.partial(jax.jit,
                   static_argnames=("hidden_dim", "output_dim", "max_time_chunk"))
def simple_lstm_forward(x, params, hidden_dim, output_dim, max_time_chunk=256):
    """x: (B, L, input_dim) float32  ->  (B, L, output_dim) float32."""
    B, L, Din = x.shape
    H, O = hidden_dim, output_dim
    f32, bf16 = jnp.float32, jnp.bfloat16

    Bp = _round_up(B, 8)          # sublane tile
    Dinp = _round_up(Din, 128)    # lane tile
    Hp = _round_up(H, 128)
    Op = _round_up(O, 128)

    # Batch block: split in two (leading *parallel* grid axis) so v7x's second
    # TensorCore runs an independent batch slice.  One block otherwise.
    Bb = Bp // 2 if (Bp >= 16 and Bp % 16 == 0) else Bp

    # VMEM-budgeted time chunk + explicit scoped-VMEM limit.
    try:
        vmem_cap = int(pltpu.get_tpu_info().vmem_capacity_bytes)
    except Exception:
        vmem_cap = 64 * 1024 * 1024   # v7x per-core physical (most constrained)
    TL = _pick_time_chunk(L, Bb, Dinp, Hp, Op,
                          budget_bytes=int(vmem_cap * 0.4),
                          cap=max_time_chunk)
    Lp = _round_up(L, TL)
    vmem_limit = min(int(vmem_cap * 0.8), 100 * 1024 * 1024)

    # Fold fc1 into the LSTM input projection (trace time, linear => exact in f32),
    # then cast MXU operands to bf16 (f32 accumulation inside the kernel).
    wf = params["w1"] @ params["wih"]                                    # (Din, 4H)
    bias = params["b1"] @ params["wih"] + params["bih"] + params["bhh"]  # (1, 4H)

    wf_p = _pad_gate_cols(_pad_to(wf, (Dinp, 4 * H)), H, Hp).astype(bf16)
    bias_p = _pad_gate_cols(bias, H, Hp).astype(f32)
    whh_p = _pad_gate_cols(_pad_to(params["whh"], (Hp, 4 * H)), H, Hp).astype(bf16)
    w2_p = _pad_to(params["w2"], (Hp, Op)).astype(bf16)
    b2_p = _pad_to(params["b2"], (1, Op)).astype(f32)

    # Time-major, padded, bf16 input (padding is zeros: padded rows/lanes inert).
    x_tm = jnp.transpose(x, (1, 0, 2))                                   # (L,B,Din)
    x_p = _pad_to(x_tm, (Lp, Bp, Dinp)).astype(bf16)                     # (Lp,Bp,Dinp)

    out_p = pl.pallas_call(
        simple_lstm_kernel,
        out_shape=jax.ShapeDtypeStruct((Lp, Bp, Op), jnp.float32),
        grid_spec=pltpu.PrefetchScalarGridSpec(
            num_scalar_prefetch=0,
            grid=(Bp // Bb, Lp // TL),            # (batch blocks, time chunks)
            in_specs=[
                pl.BlockSpec((TL, Bb, Dinp), lambda b, l: (l, b, 0)),     # x chunk
                pl.BlockSpec((Dinp, 4 * Hp), lambda b, l: (0, 0),
                             pipeline_mode=pl.Buffered(1)),               # wf
                pl.BlockSpec((1, 4 * Hp), lambda b, l: (0, 0),
                             pipeline_mode=pl.Buffered(1)),               # bias
                pl.BlockSpec((Hp, 4 * Hp), lambda b, l: (0, 0),
                             pipeline_mode=pl.Buffered(1)),               # whh
                pl.BlockSpec((Hp, Op), lambda b, l: (0, 0),
                             pipeline_mode=pl.Buffered(1)),               # w2
                pl.BlockSpec((1, Op), lambda b, l: (0, 0),
                             pipeline_mode=pl.Buffered(1)),               # b2
            ],
            out_specs=pl.BlockSpec((TL, Bb, Op), lambda b, l: (l, b, 0)),
            scratch_shapes=[
                pltpu.VMEM((TL, Bb, 4 * Hp), jnp.float32),    # gx (input-side gates)
                pltpu.VMEM((TL + 1, Bb, Hp), jnp.bfloat16),   # hidden slab (+carry)
                pltpu.VMEM((Bb, Hp), jnp.float32),            # c (carry)
            ],
        ),
        compiler_params=pltpu.CompilerParams(
            dimension_semantics=("parallel", "arbitrary"),    # time carries h/c
            vmem_limit_bytes=vmem_limit),
    )(x_p, wf_p, bias_p, whh_p, w2_p, b2_p)

    # Strip padding, back to batch-first.
    return jnp.transpose(out_p[:L, :B, :O], (1, 0, 2))


# ----------------------------------------------------------------------------
# Params + pure-JAX f32 reference (PyTorch semantics) for a sanity check
# ----------------------------------------------------------------------------
def init_params(key, input_dim, hidden_dim, output_dim):
    """Deterministic synthetic parameters (shapes match the torch module)."""
    H = hidden_dim
    ks = jax.random.split(key, 8)
    u = lambda k, shape, fan: jax.random.uniform(
        k, shape, jnp.float32, -1.0 / jnp.sqrt(fan), 1.0 / jnp.sqrt(fan))
    return {
        # fc1: torch weight (H, Din) -> stored transposed (Din, H)
        "w1": u(ks[0], (input_dim, H), input_dim),
        "b1": u(ks[1], (1, H), input_dim),
        # LSTM weight_ih_l0 (4H, H) -> transposed (H, 4H); same for hh
        "wih": u(ks[2], (H, 4 * H), H),
        "whh": u(ks[3], (H, 4 * H), H),
        "bih": u(ks[4], (1, 4 * H), H),
        "bhh": u(ks[5], (1, 4 * H), H),
        # fc2: torch weight (O, H) -> transposed (H, O)
        "w2": u(ks[6], (H, output_dim), H),
        "b2": u(ks[7], (1, output_dim), H),
    }


def reference_forward(x, params, hidden_dim, output_dim):
    B, L, _ = x.shape
    H = hidden_dim
    z = jnp.einsum("bld,dh->blh", x, params["w1"]) + params["b1"][0]

    def cell(carry, z_t):
        h, c = carry
        gates = (z_t @ params["wih"] + params["bih"][0]
                 + h @ params["whh"] + params["bhh"][0])
        i = jax.nn.sigmoid(gates[:, 0 * H:1 * H])
        f = jax.nn.sigmoid(gates[:, 1 * H:2 * H])
        g = jnp.tanh(gates[:, 2 * H:3 * H])
        o = jax.nn.sigmoid(gates[:, 3 * H:4 * H])
        c = f * c + i * g
        h = o * jnp.tanh(c)
        return (h, c), h

    h0 = jnp.zeros((B, H), jnp.float32)
    c0 = jnp.zeros((B, H), jnp.float32)
    _, hs = jax.lax.scan(cell, (h0, c0), jnp.transpose(z, (1, 0, 2)))
    hs = jnp.transpose(hs, (1, 0, 2))
    return jnp.einsum("blh,ho->blo", hs, params["w2"]) + params["b2"][0]


if __name__ == "__main__":
    B, L = 2, 8
    input_dim, hidden_dim, output_dim = 16, 32, 8

    key = jax.random.PRNGKey(0)
    kx, kp = jax.random.split(key)
    x = jax.random.normal(kx, (B, L, input_dim), jnp.float32)
    params = init_params(kp, input_dim, hidden_dim, output_dim)

    out = simple_lstm_forward(x, params, hidden_dim, output_dim)
    out = jax.block_until_ready(out)
    assert out.shape == (B, L, output_dim)

    # Tolerance loosened vs f32 reference because MXU operands are bf16.
    ref = reference_forward(x, params, hidden_dim, output_dim)
    assert jnp.allclose(out, ref, atol=7.5e-2, rtol=7.5e-2), (
        "mismatch vs JAX reference: max abs err = "
        f"{float(jnp.max(jnp.abs(out - ref)))}")

    print("KERNEL_OK")
</pallas_src>

<mosaic_0001>
module attributes {stable_mosaic.version = 11 : i64} {
  func.func @simple_lstm_kernel(%arg0: i32, %arg1: i32, %arg2: memref<8x8x128xbf16, #tpu.memory_space<vmem>>, %arg3: memref<128x512xbf16, #tpu.memory_space<vmem>>, %arg4: memref<1x512xf32, #tpu.memory_space<vmem>>, %arg5: memref<128x512xbf16, #tpu.memory_space<vmem>>, %arg6: memref<128x128xbf16, #tpu.memory_space<vmem>>, %arg7: memref<1x128xf32, #tpu.memory_space<vmem>>, %arg8: memref<8x8x128xf32, #tpu.memory_space<vmem>>, %arg9: memref<8x8x512xf32, #tpu.memory_space<vmem>>, %arg10: memref<9x8x128xbf16, #tpu.memory_space<vmem>>, %arg11: memref<8x128xf32, #tpu.memory_space<vmem>>) attributes {dimension_semantics = [#tpu.dimension_semantics<parallel>, #tpu.dimension_semantics<arbitrary>], iteration_bounds = array<i64: 1, 1>, scalar_prefetch = 0 : i64, scratch_operands = 3 : i64, tpu.core_type = #tpu.core_type<tc>, window_params = [{transform_indices = @transform_0, window_bounds = array<i64: 8, 8, 128>}, {pipeline_mode = #tpu.pipeline_mode<synchronous>, transform_indices = @transform_1, window_bounds = array<i64: 128, 512>}, {pipeline_mode = #tpu.pipeline_mode<synchronous>, transform_indices = @transform_2, window_bounds = array<i64: 1, 512>}, {pipeline_mode = #tpu.pipeline_mode<synchronous>, transform_indices = @transform_3, window_bounds = array<i64: 128, 512>}, {pipeline_mode = #tpu.pipeline_mode<synchronous>, transform_indices = @transform_4, window_bounds = array<i64: 128, 128>}, {pipeline_mode = #tpu.pipeline_mode<synchronous>, transform_indices = @transform_5, window_bounds = array<i64: 1, 128>}, {transform_indices = @transform_6, window_bounds = array<i64: 8, 8, 128>}]} {
    %c0_i32 = arith.constant 0 : i32
    %0 = arith.cmpi eq, %arg1, %c0_i32 : i32
    %1 = arith.extui %0 : i1 to i32
    %c0_i32_0 = arith.constant 0 : i32
    %2 = arith.cmpi ne, %1, %c0_i32_0 : i32
    scf.if %2 {
      %cst_193 = arith.constant 0.000000e+00 : bf16
      %401 = vector.broadcast %cst_193 : bf16 to vector<8x128xbf16>
      %c0_194 = arith.constant 0 : index
      %c0_195 = arith.constant 0 : index
      %c0_196 = arith.constant 0 : index
      %402 = vector.load %arg10[%c0_194, %c0_195, %c0_196] : memref<9x8x128xbf16, #tpu.memory_space<vmem>>, vector<1x8x128xbf16>
      %403 = vector.shape_cast %402 : vector<1x8x128xbf16> to vector<8x128xbf16>
      %404 = vector.shape_cast %401 : vector<8x128xbf16> to vector<1x8x128xbf16>
      tpu.vector_store %arg10[%c0_194, %c0_195, %c0_196], %404 {strides = array<i32>} : memref<9x8x128xbf16, #tpu.memory_space<vmem>>, vector<1x8x128xbf16>,
      %cst_197 = arith.constant 0.000000e+00 : f32
      %405 = vector.broadcast %cst_197 : f32 to vector<8x128xf32>
      %c0_198 = arith.constant 0 : index
      %c0_199 = arith.constant 0 : index
      %406 = vector.load %arg11[%c0_198, %c0_199] : memref<8x128xf32, #tpu.memory_space<vmem>>, vector<8x128xf32>
      tpu.vector_store %arg11[%c0_198, %c0_199], %405 {strides = array<i32>} : memref<8x128xf32, #tpu.memory_space<vmem>>, vector<8x128xf32>,
    } else {
    }
    %c0_i32_1 = arith.constant 0 : i32
    %3 = arith.cmpi ne, %arg1, %c0_i32_1 : i32
    %4 = arith.extui %3 : i1 to i32
    %c0_i32_2 = arith.constant 0 : i32
    %5 = arith.cmpi ne, %4, %c0_i32_2 : i32
    scf.if %5 {
      %c8 = arith.constant 8 : index
      %c0_193 = arith.constant 0 : index
      %c0_194 = arith.constant 0 : index
      %401 = vector.load %arg10[%c8, %c0_193, %c0_194] : memref<9x8x128xbf16, #tpu.memory_space<vmem>>, vector<1x8x128xbf16>
      %402 = vector.shape_cast %401 : vector<1x8x128xbf16> to vector<8x128xbf16>
      %c0_195 = arith.constant 0 : index
      %c0_196 = arith.constant 0 : index
      %c0_197 = arith.constant 0 : index
      %403 = vector.load %arg10[%c0_195, %c0_196, %c0_197] : memref<9x8x128xbf16, #tpu.memory_space<vmem>>, vector<1x8x128xbf16>
      %404 = vector.shape_cast %403 : vector<1x8x128xbf16> to vector<8x128xbf16>
      %405 = vector.shape_cast %402 : vector<8x128xbf16> to vector<1x8x128xbf16>
      tpu.vector_store %arg10[%c0_195, %c0_196, %c0_197], %405 {strides = array<i32>} : memref<9x8x128xbf16, #tpu.memory_space<vmem>>, vector<1x8x128xbf16>,
    } else {
    }
    %c0 = arith.constant 0 : index
    %c0_3 = arith.constant 0 : index
    %c0_4 = arith.constant 0 : index
    %6 = vector.load %arg2[%c0, %c0_3, %c0_4] : memref<8x8x128xbf16, #tpu.memory_space<vmem>>, vector<8x8x128xbf16>
    %7 = vector.shape_cast %6 : vector<8x8x128xbf16> to vector<64x128xbf16>
    %c0_5 = arith.constant 0 : index
    %c0_6 = arith.constant 0 : index
    %8 = vector.load %arg3[%c0_5, %c0_6] : memref<128x512xbf16, #tpu.memory_space<vmem>>, vector<128x512xbf16>
    %cst = arith.constant dense<0.000000e+00> : vector<64x512xf32>
    %9 = tpu.matmul %7, %8, %cst {dimension_numbers = #tpu.dot_dimension_numbers<[1], [0], [0], [1], [0, 0, 1, 1], [], []>} : vector<64x128xbf16>, vector<128x512xbf16>, vector<64x512xf32> -> vector<64x512xf32>
    %c0_7 = arith.constant 0 : index
    %c0_8 = arith.constant 0 : index
    %10 = vector.load %arg4[%c0_7, %c0_8] : memref<1x512xf32, #tpu.memory_space<vmem>>, vector<1x512xf32>
    %11 = vector.broadcast %10 : vector<1x512xf32> to vector<64x512xf32>
    %12 = arith.addf %9, %11 : vector<64x512xf32>
    %13 = vector.shape_cast %12 : vector<64x512xf32> to vector<8x8x512xf32>
    %c0_9 = arith.constant 0 : index
    %c0_10 = arith.constant 0 : index
    %c0_11 = arith.constant 0 : index
    %14 = vector.load %arg9[%c0_9, %c0_10, %c0_11] : memref<8x8x512xf32, #tpu.memory_space<vmem>>, vector<8x8x512xf32>
    tpu.vector_store %arg9[%c0_9, %c0_10, %c0_11], %13 {strides = array<i32>} : memref<8x8x512xf32, #tpu.memory_space<vmem>>, vector<8x8x512xf32>,
    %c0_12 = arith.constant 0 : index
    %c0_13 = arith.constant 0 : index
    %15 = vector.load %arg5[%c0_12, %c0_13] : memref<128x512xbf16, #tpu.memory_space<vmem>>, vector<128x512xbf16>
    %c0_i32_14 = arith.constant 0 : i32
    %16 = arith.index_cast %c0_i32_14 : i32 to index
    %c0_15 = arith.constant 0 : index
    %c0_16 = arith.constant 0 : index
    %17 = vector.load %arg10[%16, %c0_15, %c0_16] : memref<9x8x128xbf16, #tpu.memory_space<vmem>>, vector<1x8x128xbf16>
    %18 = vector.shape_cast %17 : vector<1x8x128xbf16> to vector<8x128xbf16>
    %19 = arith.index_cast %c0_i32_14 : i32 to index
    %c0_17 = arith.constant 0 : index
    %c0_18 = arith.constant 0 : index
    %20 = vector.load %arg9[%19, %c0_17, %c0_18] : memref<8x8x512xf32, #tpu.memory_space<vmem>>, vector<1x8x512xf32>
    %21 = vector.shape_cast %20 : vector<1x8x512xf32> to vector<8x512xf32>
    %cst_19 = arith.constant dense<0.000000e+00> : vector<8x512xf32>
    %22 = tpu.matmul %18, %15, %cst_19 {dimension_numbers = #tpu.dot_dimension_numbers<[1], [0], [0], [1], [0, 0, 1, 1], [], []>} : vector<8x128xbf16>, vector<128x512xbf16>, vector<8x512xf32> -> vector<8x512xf32>
    %23 = arith.addf %21, %22 : vector<8x512xf32>
    %24 = vector.extract_strided_slice %23 {offsets = [0, 0], sizes = [8, 128], strides = [1, 1]} : vector<8x512xf32> to vector<8x128xf32>
    %cst_20 = arith.constant 5.000000e-01 : f32
    %25 = vector.broadcast %cst_20 : f32 to vector<8x128xf32>
    %26 = arith.mulf %25, %24 : vector<8x128xf32>
    %27 = math.tanh %26 : vector<8x128xf32>
    %cst_21 = arith.constant 1.000000e+00 : f32
    %28 = vector.broadcast %cst_21 : f32 to vector<8x128xf32>
    %29 = arith.addf %28, %27 : vector<8x128xf32>
    %cst_22 = arith.constant 5.000000e-01 : f32
    %30 = vector.broadcast %cst_22 : f32 to vector<8x128xf32>
    %31 = arith.mulf %30, %29 : vector<8x128xf32>
    %32 = vector.extract_strided_slice %23 {offsets = [0, 128], sizes = [8, 128], strides = [1, 1]} : vector<8x512xf32> to vector<8x128xf32>
    %cst_23 = arith.constant 5.000000e-01 : f32
    %33 = vector.broadcast %cst_23 : f32 to vector<8x128xf32>
    %34 = arith.mulf %33, %32 : vector<8x128xf32>
    %35 = math.tanh %34 : vector<8x128xf32>
    %cst_24 = arith.constant 1.000000e+00 : f32
    %36 = vector.broadcast %cst_24 : f32 to vector<8x128xf32>
    %37 = arith.addf %36, %35 : vector<8x128xf32>
    %cst_25 = arith.constant 5.000000e-01 : f32
    %38 = vector.broadcast %cst_25 : f32 to vector<8x128xf32>
    %39 = arith.mulf %38, %37 : vector<8x128xf32>
    %40 = vector.extract_strided_slice %23 {offsets = [0, 256], sizes = [8, 128], strides = [1, 1]} : vector<8x512xf32> to vector<8x128xf32>
    %41 = math.tanh %40 : vector<8x128xf32>
    %42 = vector.extract_strided_slice %23 {offsets = [0, 384], sizes = [8, 128], strides = [1, 1]} : vector<8x512xf32> to vector<8x128xf32>
    %cst_26 = arith.constant 5.000000e-01 : f32
    %43 = vector.broadcast %cst_26 : f32 to vector<8x128xf32>
    %44 = arith.mulf %43, %42 : vector<8x128xf32>
    %45 = math.tanh %44 : vector<8x128xf32>
    %cst_27 = arith.constant 1.000000e+00 : f32
    %46 = vector.broadcast %cst_27 : f32 to vector<8x128xf32>
    %47 = arith.addf %46, %45 : vector<8x128xf32>
    %cst_28 = arith.constant 5.000000e-01 : f32
    %48 = vector.broadcast %cst_28 : f32 to vector<8x128xf32>
    %49 = arith.mulf %48, %47 : vector<8x128xf32>
    %c0_29 = arith.constant 0 : index
    %c0_30 = arith.constant 0 : index
    %50 = vector.load %arg11[%c0_29, %c0_30] : memref<8x128xf32, #tpu.memory_space<vmem>>, vector<8x128xf32>
    %51 = arith.mulf %39, %50 : vector<8x128xf32>
    %52 = arith.mulf %31, %41 : vector<8x128xf32>
    %53 = arith.addf %51, %52 : vector<8x128xf32>
    %c0_31 = arith.constant 0 : index
    %c0_32 = arith.constant 0 : index
    %54 = vector.load %arg11[%c0_31, %c0_32] : memref<8x128xf32, #tpu.memory_space<vmem>>, vector<8x128xf32>
    tpu.vector_store %arg11[%c0_31, %c0_32], %53 {strides = array<i32>} : memref<8x128xf32, #tpu.memory_space<vmem>>, vector<8x128xf32>,
    %55 = math.tanh %53 : vector<8x128xf32>
    %56 = arith.mulf %49, %55 : vector<8x128xf32>
    %57 = arith.truncf %56 : vector<8x128xf32> to vector<8x128xbf16>
    %c1_i32 = arith.constant 1 : i32
    %58 = arith.addi %c0_i32_14, %c1_i32 : i32
    %59 = arith.index_cast %58 : i32 to index
    %c0_33 = arith.constant 0 : index
    %c0_34 = arith.constant 0 : index
    %60 = vector.load %arg10[%59, %c0_33, %c0_34] : memref<9x8x128xbf16, #tpu.memory_space<vmem>>, vector<1x8x128xbf16>
    %61 = vector.shape_cast %60 : vector<1x8x128xbf16> to vector<8x128xbf16>
    %62 = vector.shape_cast %57 : vector<8x128xbf16> to vector<1x8x128xbf16>
    tpu.vector_store %arg10[%59, %c0_33, %c0_34], %62 {strides = array<i32>} : memref<9x8x128xbf16, #tpu.memory_space<vmem>>, vector<1x8x128xbf16>,
    %c1_i32_35 = arith.constant 1 : i32
    %63 = arith.index_cast %c1_i32_35 : i32 to index
    %c0_36 = arith.constant 0 : index
    %c0_37 = arith.constant 0 : index
    %64 = vector.load %arg10[%63, %c0_36, %c0_37] : memref<9x8x128xbf16, #tpu.memory_space<vmem>>, vector<1x8x128xbf16>
    %65 = vector.shape_cast %64 : vector<1x8x128xbf16> to vector<8x128xbf16>
    %66 = arith.index_cast %c1_i32_35 : i32 to index
    %c0_38 = arith.constant 0 : index
    %c0_39 = arith.constant 0 : index
    %67 = vector.load %arg9[%66, %c0_38, %c0_39] : memref<8x8x512xf32, #tpu.memory_space<vmem>>, vector<1x8x512xf32>
    %68 = vector.shape_cast %67 : vector<1x8x512xf32> to vector<8x512xf32>
    %cst_40 = arith.constant dense<0.000000e+00> : vector<8x512xf32>
    %69 = tpu.matmul %65, %15, %cst_40 {dimension_numbers = #tpu.dot_dimension_numbers<[1], [0], [0], [1], [0, 0, 1, 1], [], []>} : vector<8x128xbf16>, vector<128x512xbf16>, vector<8x512xf32> -> vector<8x512xf32>
    %70 = arith.addf %68, %69 : vector<8x512xf32>
    %71 = vector.extract_strided_slice %70 {offsets = [0, 0], sizes = [8, 128], strides = [1, 1]} : vector<8x512xf32> to vector<8x128xf32>
    %cst_41 = arith.constant 5.000000e-01 : f32
    %72 = vector.broadcast %cst_41 : f32 to vector<8x128xf32>
    %73 = arith.mulf %72, %71 : vector<8x128xf32>
    %74 = math.tanh %73 : vector<8x128xf32>
    %cst_42 = arith.constant 1.000000e+00 : f32
    %75 = vector.broadcast %cst_42 : f32 to vector<8x128xf32>
    %76 = arith.addf %75, %74 : vector<8x128xf32>
    %cst_43 = arith.constant 5.000000e-01 : f32
    %77 = vector.broadcast %cst_43 : f32 to vector<8x128xf32>
    %78 = arith.mulf %77, %76 : vector<8x128xf32>
    %79 = vector.extract_strided_slice %70 {offsets = [0, 128], sizes = [8, 128], strides = [1, 1]} : vector<8x512xf32> to vector<8x128xf32>
    %cst_44 = arith.constant 5.000000e-01 : f32
    %80 = vector.broadcast %cst_44 : f32 to vector<8x128xf32>
    %81 = arith.mulf %80, %79 : vector<8x128xf32>
    %82 = math.tanh %81 : vector<8x128xf32>
    %cst_45 = arith.constant 1.000000e+00 : f32
    %83 = vector.broadcast %cst_45 : f32 to vector<8x128xf32>
    %84 = arith.addf %83, %82 : vector<8x128xf32>
    %cst_46 = arith.constant 5.000000e-01 : f32
    %85 = vector.broadcast %cst_46 : f32 to vector<8x128xf32>
    %86 = arith.mulf %85, %84 : vector<8x128xf32>
    %87 = vector.extract_strided_slice %70 {offsets = [0, 256], sizes = [8, 128], strides = [1, 1]} : vector<8x512xf32> to vector<8x128xf32>
    %88 = math.tanh %87 : vector<8x128xf32>
    %89 = vector.extract_strided_slice %70 {offsets = [0, 384], sizes = [8, 128], strides = [1, 1]} : vector<8x512xf32> to vector<8x128xf32>
    %cst_47 = arith.constant 5.000000e-01 : f32
    %90 = vector.broadcast %cst_47 : f32 to vector<8x128xf32>
    %91 = arith.mulf %90, %89 : vector<8x128xf32>
    %92 = math.tanh %91 : vector<8x128xf32>
    %cst_48 = arith.constant 1.000000e+00 : f32
    %93 = vector.broadcast %cst_48 : f32 to vector<8x128xf32>
    %94 = arith.addf %93, %92 : vector<8x128xf32>
    %cst_49 = arith.constant 5.000000e-01 : f32
    %95 = vector.broadcast %cst_49 : f32 to vector<8x128xf32>
    %96 = arith.mulf %95, %94 : vector<8x128xf32>
    %c0_50 = arith.constant 0 : index
    %c0_51 = arith.constant 0 : index
    %97 = vector.load %arg11[%c0_50, %c0_51] : memref<8x128xf32, #tpu.memory_space<vmem>>, vector<8x128xf32>
    %98 = arith.mulf %86, %97 : vector<8x128xf32>
    %99 = arith.mulf %78, %88 : vector<8x128xf32>
    %100 = arith.addf %98, %99 : vector<8x128xf32>
    %c0_52 = arith.constant 0 : index
    %c0_53 = arith.constant 0 : index
    %101 = vector.load %arg11[%c0_52, %c0_53] : memref<8x128xf32, #tpu.memory_space<vmem>>, vector<8x128xf32>
    tpu.vector_store %arg11[%c0_52, %c0_53], %100 {strides = array<i32>} : memref<8x128xf32, #tpu.memory_space<vmem>>, vector<8x128xf32>,
    %102 = math.tanh %100 : vector<8x128xf32>
    %103 = arith.mulf %96, %102 : vector<8x128xf32>
    %104 = arith.truncf %103 : vector<8x128xf32> to vector<8x128xbf16>
    %c1_i32_54 = arith.constant 1 : i32
    %105 = arith.addi %c1_i32_35, %c1_i32_54 : i32
    %106 = arith.index_cast %105 : i32 to index
    %c0_55 = arith.constant 0 : index
    %c0_56 = arith.constant 0 : index
    %107 = vector.load %arg10[%106, %c0_55, %c0_56] : memref<9x8x128xbf16, #tpu.memory_space<vmem>>, vector<1x8x128xbf16>
    %108 = vector.shape_cast %107 : vector<1x8x128xbf16> to vector<8x128xbf16>
    %109 = vector.shape_cast %104 : vector<8x128xbf16> to vector<1x8x128xbf16>
    tpu.vector_store %arg10[%106, %c0_55, %c0_56], %109 {strides = array<i32>} : memref<9x8x128xbf16, #tpu.memory_space<vmem>>, vector<1x8x128xbf16>,
    %c2_i32 = arith.constant 2 : i32
    %110 = arith.index_cast %c2_i32 : i32 to index
    %c0_57 = arith.constant 0 : index
    %c0_58 = arith.constant 0 : index
    %111 = vector.load %arg10[%110, %c0_57, %c0_58] : memref<9x8x128xbf16, #tpu.memory_space<vmem>>, vector<1x8x128xbf16>
    %112 = vector.shape_cast %111 : vector<1x8x128xbf16> to vector<8x128xbf16>
    %113 = arith.index_cast %c2_i32 : i32 to index
    %c0_59 = arith.constant 0 : index
    %c0_60 = arith.constant 0 : index
    %114 = vector.load %arg9[%113, %c0_59, %c0_60] : memref<8x8x512xf32, #tpu.memory_space<vmem>>, vector<1x8x512xf32>
    %115 = vector.shape_cast %114 : vector<1x8x512xf32> to vector<8x512xf32>
    %cst_61 = arith.constant dense<0.000000e+00> : vector<8x512xf32>
    %116 = tpu.matmul %112, %15, %cst_61 {dimension_numbers = #tpu.dot_dimension_numbers<[1], [0], [0], [1], [0, 0, 1, 1], [], []>} : vector<8x128xbf16>, vector<128x512xbf16>, vector<8x512xf32> -> vector<8x512xf32>
    %117 = arith.addf %115, %116 : vector<8x512xf32>
    %118 = vector.extract_strided_slice %117 {offsets = [0, 0], sizes = [8, 128], strides = [1, 1]} : vector<8x512xf32> to vector<8x128xf32>
    %cst_62 = arith.constant 5.000000e-01 : f32
    %119 = vector.broadcast %cst_62 : f32 to vector<8x128xf32>
    %120 = arith.mulf %119, %118 : vector<8x128xf32>
    %121 = math.tanh %120 : vector<8x128xf32>
    %cst_63 = arith.constant 1.000000e+00 : f32
    %122 = vector.broadcast %cst_63 : f32 to vector<8x128xf32>
    %123 = arith.addf %122, %121 : vector<8x128xf32>
    %cst_64 = arith.constant 5.000000e-01 : f32
    %124 = vector.broadcast %cst_64 : f32 to vector<8x128xf32>
    %125 = arith.mulf %124, %123 : vector<8x128xf32>
    %126 = vector.extract_strided_slice %117 {offsets = [0, 128], sizes = [8, 128], strides = [1, 1]} : vector<8x512xf32> to vector<8x128xf32>
    %cst_65 = arith.constant 5.000000e-01 : f32
    %127 = vector.broadcast %cst_65 : f32 to vector<8x128xf32>
    %128 = arith.mulf %127, %126 : vector<8x128xf32>
    %129 = math.tanh %128 : vector<8x128xf32>
    %cst_66 = arith.constant 1.000000e+00 : f32
    %130 = vector.broadcast %cst_66 : f32 to vector<8x128xf32>
    %131 = arith.addf %130, %129 : vector<8x128xf32>
    %cst_67 = arith.constant 5.000000e-01 : f32
    %132 = vector.broadcast %cst_67 : f32 to vector<8x128xf32>
    %133 = arith.mulf %132, %131 : vector<8x128xf32>
    %134 = vector.extract_strided_slice %117 {offsets = [0, 256], sizes = [8, 128], strides = [1, 1]} : vector<8x512xf32> to vector<8x128xf32>
    %135 = math.tanh %134 : vector<8x128xf32>
    %136 = vector.extract_strided_slice %117 {offsets = [0, 384], sizes = [8, 128], strides = [1, 1]} : vector<8x512xf32> to vector<8x128xf32>
    %cst_68 = arith.constant 5.000000e-01 : f32
    %137 = vector.broadcast %cst_68 : f32 to vector<8x128xf32>
    %138 = arith.mulf %137, %136 : vector<8x128xf32>
    %139 = math.tanh %138 : vector<8x128xf32>
    %cst_69 = arith.constant 1.000000e+00 : f32
    %140 = vector.broadcast %cst_69 : f32 to vector<8x128xf32>
    %141 = arith.addf %140, %139 : vector<8x128xf32>
    %cst_70 = arith.constant 5.000000e-01 : f32
    %142 = vector.broadcast %cst_70 : f32 to vector<8x128xf32>
    %143 = arith.mulf %142, %141 : vector<8x128xf32>
    %c0_71 = arith.constant 0 : index
    %c0_72 = arith.constant 0 : index
    %144 = vector.load %arg11[%c0_71, %c0_72] : memref<8x128xf32, #tpu.memory_space<vmem>>, vector<8x128xf32>
    %145 = arith.mulf %133, %144 : vector<8x128xf32>
    %146 = arith.mulf %125, %135 : vector<8x128xf32>
    %147 = arith.addf %145, %146 : vector<8x128xf32>
    %c0_73 = arith.constant 0 : index
    %c0_74 = arith.constant 0 : index
    %148 = vector.load %arg11[%c0_73, %c0_74] : memref<8x128xf32, #tpu.memory_space<vmem>>, vector<8x128xf32>
    tpu.vector_store %arg11[%c0_73, %c0_74], %147 {strides = array<i32>} : memref<8x128xf32, #tpu.memory_space<vmem>>, vector<8x128xf32>,
    %149 = math.tanh %147 : vector<8x128xf32>
    %150 = arith.mulf %143, %149 : vector<8x128xf32>
    %151 = arith.truncf %150 : vector<8x128xf32> to vector<8x128xbf16>
    %c1_i32_75 = arith.constant 1 : i32
    %152 = arith.addi %c2_i32, %c1_i32_75 : i32
    %153 = arith.index_cast %152 : i32 to index
    %c0_76 = arith.constant 0 : index
    %c0_77 = arith.constant 0 : index
    %154 = vector.load %arg10[%153, %c0_76, %c0_77] : memref<9x8x128xbf16, #tpu.memory_space<vmem>>, vector<1x8x128xbf16>
    %155 = vector.shape_cast %154 : vector<1x8x128xbf16> to vector<8x128xbf16>
    %156 = vector.shape_cast %151 : vector<8x128xbf16> to vector<1x8x128xbf16>
    tpu.vector_store %arg10[%153, %c0_76, %c0_77], %156 {strides = array<i32>} : memref<9x8x128xbf16, #tpu.memory_space<vmem>>, vector<1x8x128xbf16>,
    %c3_i32 = arith.constant 3 : i32
    %157 = arith.index_cast %c3_i32 : i32 to index
    %c0_78 = arith.constant 0 : index
    %c0_79 = arith.constant 0 : index
    %158 = vector.load %arg10[%157, %c0_78, %c0_79] : memref<9x8x128xbf16, #tpu.memory_space<vmem>>, vector<1x8x128xbf16>
    %159 = vector.shape_cast %158 : vector<1x8x128xbf16> to vector<8x128xbf16>
    %160 = arith.index_cast %c3_i32 : i32 to index
    %c0_80 = arith.constant 0 : index
    %c0_81 = arith.constant 0 : index
    %161 = vector.load %arg9[%160, %c0_80, %c0_81] : memref<8x8x512xf32, #tpu.memory_space<vmem>>, vector<1x8x512xf32>
    %162 = vector.shape_cast %161 : vector<1x8x512xf32> to vector<8x512xf32>
    %cst_82 = arith.constant dense<0.000000e+00> : vector<8x512xf32>
    %163 = tpu.matmul %159, %15, %cst_82 {dimension_numbers = #tpu.dot_dimension_numbers<[1], [0], [0], [1], [0, 0, 1, 1], [], []>} : vector<8x128xbf16>, vector<128x512xbf16>, vector<8x512xf32> -> vector<8x512xf32>
    %164 = arith.addf %162, %163 : vector<8x512xf32>
    %165 = vector.extract_strided_slice %164 {offsets = [0, 0], sizes = [8, 128], strides = [1, 1]} : vector<8x512xf32> to vector<8x128xf32>
    %cst_83 = arith.constant 5.000000e-01 : f32
    %166 = vector.broadcast %cst_83 : f32 to vector<8x128xf32>
    %167 = arith.mulf %166, %165 : vector<8x128xf32>
    %168 = math.tanh %167 : vector<8x128xf32>
    %cst_84 = arith.constant 1.000000e+00 : f32
    %169 = vector.broadcast %cst_84 : f32 to vector<8x128xf32>
    %170 = arith.addf %169, %168 : vector<8x128xf32>
    %cst_85 = arith.constant 5.000000e-01 : f32
    %171 = vector.broadcast %cst_85 : f32 to vector<8x128xf32>
    %172 = arith.mulf %171, %170 : vector<8x128xf32>
    %173 = vector.extract_strided_slice %164 {offsets = [0, 128], sizes = [8, 128], strides = [1, 1]} : vector<8x512xf32> to vector<8x128xf32>
    %cst_86 = arith.constant 5.000000e-01 : f32
    %174 = vector.broadcast %cst_86 : f32 to vector<8x128xf32>
    %175 = arith.mulf %174, %173 : vector<8x128xf32>
    %176 = math.tanh %175 : vector<8x128xf32>
    %cst_87 = arith.constant 1.000000e+00 : f32
    %177 = vector.broadcast %cst_87 : f32 to vector<8x128xf32>
    %178 = arith.addf %177, %176 : vector<8x128xf32>
    %cst_88 = arith.constant 5.000000e-01 : f32
    %179 = vector.broadcast %cst_88 : f32 to vector<8x128xf32>
    %180 = arith.mulf %179, %178 : vector<8x128xf32>
    %181 = vector.extract_strided_slice %164 {offsets = [0, 256], sizes = [8, 128], strides = [1, 1]} : vector<8x512xf32> to vector<8x128xf32>
    %182 = math.tanh %181 : vector<8x128xf32>
    %183 = vector.extract_strided_slice %164 {offsets = [0, 384], sizes = [8, 128], strides = [1, 1]} : vector<8x512xf32> to vector<8x128xf32>
    %cst_89 = arith.constant 5.000000e-01 : f32
    %184 = vector.broadcast %cst_89 : f32 to vector<8x128xf32>
    %185 = arith.mulf %184, %183 : vector<8x128xf32>
    %186 = math.tanh %185 : vector<8x128xf32>
    %cst_90 = arith.constant 1.000000e+00 : f32
    %187 = vector.broadcast %cst_90 : f32 to vector<8x128xf32>
    %188 = arith.addf %187, %186 : vector<8x128xf32>
    %cst_91 = arith.constant 5.000000e-01 : f32
    %189 = vector.broadcast %cst_91 : f32 to vector<8x128xf32>
    %190 = arith.mulf %189, %188 : vector<8x128xf32>
    %c0_92 = arith.constant 0 : index
    %c0_93 = arith.constant 0 : index
    %191 = vector.load %arg11[%c0_92, %c0_93] : memref<8x128xf32, #tpu.memory_space<vmem>>, vector<8x128xf32>
    %192 = arith.mulf %180, %191 : vector<8x128xf32>
    %193 = arith.mulf %172, %182 : vector<8x128xf32>
    %194 = arith.addf %192, %193 : vector<8x128xf32>
    %c0_94 = arith.constant 0 : index
    %c0_95 = arith.constant 0 : index
    %195 = vector.load %arg11[%c0_94, %c0_95] : memref<8x128xf32, #tpu.memory_space<vmem>>, vector<8x128xf32>
    tpu.vector_store %arg11[%c0_94, %c0_95], %194 {strides = array<i32>} : memref<8x128xf32, #tpu.memory_space<vmem>>, vector<8x128xf32>,
    %196 = math.tanh %194 : vector<8x128xf32>
    %197 = arith.mulf %190, %196 : vector<8x128xf32>
    %198 = arith.truncf %197 : vector<8x128xf32> to vector<8x128xbf16>
    %c1_i32_96 = arith.constant 1 : i32
    %199 = arith.addi %c3_i32, %c1_i32_96 : i32
    %200 = arith.index_cast %199 : i32 to index
    %c0_97 = arith.constant 0 : index
    %c0_98 = arith.constant 0 : index
    %201 = vector.load %arg10[%200, %c0_97, %c0_98] : memref<9x8x128xbf16, #tpu.memory_space<vmem>>, vector<1x8x128xbf16>
    %202 = vector.shape_cast %201 : vector<1x8x128xbf16> to vector<8x128xbf16>
    %203 = vector.shape_cast %198 : vector<8x128xbf16> to vector<1x8x128xbf16>
    tpu.vector_store %arg10[%200, %c0_97, %c0_98], %203 {strides = array<i32>} : memref<9x8x128xbf16, #tpu.memory_space<vmem>>, vector<1x8x128xbf16>,
    %c4_i32 = arith.constant 4 : i32
    %204 = arith.index_cast %c4_i32 : i32 to index
    %c0_99 = arith.constant 0 : index
    %c0_100 = arith.constant 0 : index
    %205 = vector.load %arg10[%204, %c0_99, %c0_100] : memref<9x8x128xbf16, #tpu.memory_space<vmem>>, vector<1x8x128xbf16>
    %206 = vector.shape_cast %205 : vector<1x8x128xbf16> to vector<8x128xbf16>
    %207 = arith.index_cast %c4_i32 : i32 to index
    %c0_101 = arith.constant 0 : index
    %c0_102 = arith.constant 0 : index
    %208 = vector.load %arg9[%207, %c0_101, %c0_102] : memref<8x8x512xf32, #tpu.memory_space<vmem>>, vector<1x8x512xf32>
    %209 = vector.shape_cast %208 : vector<1x8x512xf32> to vector<8x512xf32>
    %cst_103 = arith.constant dense<0.000000e+00> : vector<8x512xf32>
    %210 = tpu.matmul %206, %15, %cst_103 {dimension_numbers = #tpu.dot_dimension_numbers<[1], [0], [0], [1], [0, 0, 1, 1], [], []>} : vector<8x128xbf16>, vector<128x512xbf16>, vector<8x512xf32> -> vector<8x512xf32>
    %211 = arith.addf %209, %210 : vector<8x512xf32>
    %212 = vector.extract_strided_slice %211 {offsets = [0, 0], sizes = [8, 128], strides = [1, 1]} : vector<8x512xf32> to vector<8x128xf32>
    %cst_104 = arith.constant 5.000000e-01 : f32
    %213 = vector.broadcast %cst_104 : f32 to vector<8x128xf32>
    %214 = arith.mulf %213, %212 : vector<8x128xf32>
    %215 = math.tanh %214 : vector<8x128xf32>
    %cst_105 = arith.constant 1.000000e+00 : f32
    %216 = vector.broadcast %cst_105 : f32 to vector<8x128xf32>
    %217 = arith.addf %216, %215 : vector<8x128xf32>
    %cst_106 = arith.constant 5.000000e-01 : f32
    %218 = vector.broadcast %cst_106 : f32 to vector<8x128xf32>
    %219 = arith.mulf %218, %217 : vector<8x128xf32>
    %220 = vector.extract_strided_slice %211 {offsets = [0, 128], sizes = [8, 128], strides = [1, 1]} : vector<8x512xf32> to vector<8x128xf32>
    %cst_107 = arith.constant 5.000000e-01 : f32
    %221 = vector.broadcast %cst_107 : f32 to vector<8x128xf32>
    %222 = arith.mulf %221, %220 : vector<8x128xf32>
    %223 = math.tanh %222 : vector<8x128xf32>
    %cst_108 = arith.constant 1.000000e+00 : f32
    %224 = vector.broadcast %cst_108 : f32 to vector<8x128xf32>
    %225 = arith.addf %224, %223 : vector<8x128xf32>
    %cst_109 = arith.constant 5.000000e-01 : f32
    %226 = vector.broadcast %cst_109 : f32 to vector<8x128xf32>
    %227 = arith.mulf %226, %225 : vector<8x128xf32>
    %228 = vector.extract_strided_slice %211 {offsets = [0, 256], sizes = [8, 128], strides = [1, 1]} : vector<8x512xf32> to vector<8x128xf32>
    %229 = math.tanh %228 : vector<8x128xf32>
    %230 = vector.extract_strided_slice %211 {offsets = [0, 384], sizes = [8, 128], strides = [1, 1]} : vector<8x512xf32> to vector<8x128xf32>
    %cst_110 = arith.constant 5.000000e-01 : f32
    %231 = vector.broadcast %cst_110 : f32 to vector<8x128xf32>
    %232 = arith.mulf %231, %230 : vector<8x128xf32>
    %233 = math.tanh %232 : vector<8x128xf32>
    %cst_111 = arith.constant 1.000000e+00 : f32
    %234 = vector.broadcast %cst_111 : f32 to vector<8x128xf32>
    %235 = arith.addf %234, %233 : vector<8x128xf32>
    %cst_112 = arith.constant 5.000000e-01 : f32
    %236 = vector.broadcast %cst_112 : f32 to vector<8x128xf32>
    %237 = arith.mulf %236, %235 : vector<8x128xf32>
    %c0_113 = arith.constant 0 : index
    %c0_114 = arith.constant 0 : index
    %238 = vector.load %arg11[%c0_113, %c0_114] : memref<8x128xf32, #tpu.memory_space<vmem>>, vector<8x128xf32>
    %239 = arith.mulf %227, %238 : vector<8x128xf32>
    %240 = arith.mulf %219, %229 : vector<8x128xf32>
    %241 = arith.addf %239, %240 : vector<8x128xf32>
    %c0_115 = arith.constant 0 : index
    %c0_116 = arith.constant 0 : index
    %242 = vector.load %arg11[%c0_115, %c0_116] : memref<8x128xf32, #tpu.memory_space<vmem>>, vector<8x128xf32>
    tpu.vector_store %arg11[%c0_115, %c0_116], %241 {strides = array<i32>} : memref<8x128xf32, #tpu.memory_space<vmem>>, vector<8x128xf32>,
    %243 = math.tanh %241 : vector<8x128xf32>
    %244 = arith.mulf %237, %243 : vector<8x128xf32>
    %245 = arith.truncf %244 : vector<8x128xf32> to vector<8x128xbf16>
    %c1_i32_117 = arith.constant 1 : i32
    %246 = arith.addi %c4_i32, %c1_i32_117 : i32
    %247 = arith.index_cast %246 : i32 to index
    %c0_118 = arith.constant 0 : index
    %c0_119 = arith.constant 0 : index
    %248 = vector.load %arg10[%247, %c0_118, %c0_119] : memref<9x8x128xbf16, #tpu.memory_space<vmem>>, vector<1x8x128xbf16>
    %249 = vector.shape_cast %248 : vector<1x8x128xbf16> to vector<8x128xbf16>
    %250 = vector.shape_cast %245 : vector<8x128xbf16> to vector<1x8x128xbf16>
    tpu.vector_store %arg10[%247, %c0_118, %c0_119], %250 {strides = array<i32>} : memref<9x8x128xbf16, #tpu.memory_space<vmem>>, vector<1x8x128xbf16>,
    %c5_i32 = arith.constant 5 : i32
    %251 = arith.index_cast %c5_i32 : i32 to index
    %c0_120 = arith.constant 0 : index
    %c0_121 = arith.constant 0 : index
    %252 = vector.load %arg10[%251, %c0_120, %c0_121] : memref<9x8x128xbf16, #tpu.memory_space<vmem>>, vector<1x8x128xbf16>
    %253 = vector.shape_cast %252 : vector<1x8x128xbf16> to vector<8x128xbf16>
    %254 = arith.index_cast %c5_i32 : i32 to index
    %c0_122 = arith.constant 0 : index
    %c0_123 = arith.constant 0 : index
    %255 = vector.load %arg9[%254, %c0_122, %c0_123] : memref<8x8x512xf32, #tpu.memory_space<vmem>>, vector<1x8x512xf32>
    %256 = vector.shape_cast %255 : vector<1x8x512xf32> to vector<8x512xf32>
    %cst_124 = arith.constant dense<0.000000e+00> : vector<8x512xf32>
    %257 = tpu.matmul %253, %15, %cst_124 {dimension_numbers = #tpu.dot_dimension_numbers<[1], [0], [0], [1], [0, 0, 1, 1], [], []>} : vector<8x128xbf16>, vector<128x512xbf16>, vector<8x512xf32> -> vector<8x512xf32>
    %258 = arith.addf %256, %257 : vector<8x512xf32>
    %259 = vector.extract_strided_slice %258 {offsets = [0, 0], sizes = [8, 128], strides = [1, 1]} : vector<8x512xf32> to vector<8x128xf32>
    %cst_125 = arith.constant 5.000000e-01 : f32
    %260 = vector.broadcast %cst_125 : f32 to vector<8x128xf32>
    %261 = arith.mulf %260, %259 : vector<8x128xf32>
    %262 = math.tanh %261 : vector<8x128xf32>
    %cst_126 = arith.constant 1.000000e+00 : f32
    %263 = vector.broadcast %cst_126 : f32 to vector<8x128xf32>
    %264 = arith.addf %263, %262 : vector<8x128xf32>
    %cst_127 = arith.constant 5.000000e-01 : f32
    %265 = vector.broadcast %cst_127 : f32 to vector<8x128xf32>
    %266 = arith.mulf %265, %264 : vector<8x128xf32>
    %267 = vector.extract_strided_slice %258 {offsets = [0, 128], sizes = [8, 128], strides = [1, 1]} : vector<8x512xf32> to vector<8x128xf32>
    %cst_128 = arith.constant 5.000000e-01 : f32
    %268 = vector.broadcast %cst_128 : f32 to vector<8x128xf32>
    %269 = arith.mulf %268, %267 : vector<8x128xf32>
    %270 = math.tanh %269 : vector<8x128xf32>
    %cst_129 = arith.constant 1.000000e+00 : f32
    %271 = vector.broadcast %cst_129 : f32 to vector<8x128xf32>
    %272 = arith.addf %271, %270 : vector<8x128xf32>
    %cst_130 = arith.constant 5.000000e-01 : f32
    %273 = vector.broadcast %cst_130 : f32 to vector<8x128xf32>
    %274 = arith.mulf %273, %272 : vector<8x128xf32>
    %275 = vector.extract_strided_slice %258 {offsets = [0, 256], sizes = [8, 128], strides = [1, 1]} : vector<8x512xf32> to vector<8x128xf32>
    %276 = math.tanh %275 : vector<8x128xf32>
    %277 = vector.extract_strided_slice %258 {offsets = [0, 384], sizes = [8, 128], strides = [1, 1]} : vector<8x512xf32> to vector<8x128xf32>
    %cst_131 = arith.constant 5.000000e-01 : f32
    %278 = vector.broadcast %cst_131 : f32 to vector<8x128xf32>
    %279 = arith.mulf %278, %277 : vector<8x128xf32>
    %280 = math.tanh %279 : vector<8x128xf32>
    %cst_132 = arith.constant 1.000000e+00 : f32
    %281 = vector.broadcast %cst_132 : f32 to vector<8x128xf32>
    %282 = arith.addf %281, %280 : vector<8x128xf32>
    %cst_133 = arith.constant 5.000000e-01 : f32
    %283 = vector.broadcast %cst_133 : f32 to vector<8x128xf32>
    %284 = arith.mulf %283, %282 : vector<8x128xf32>
    %c0_134 = arith.constant 0 : index
    %c0_135 = arith.constant 0 : index
    %285 = vector.load %arg11[%c0_134, %c0_135] : memref<8x128xf32, #tpu.memory_space<vmem>>, vector<8x128xf32>
    %286 = arith.mulf %274, %285 : vector<8x128xf32>
    %287 = arith.mulf %266, %276 : vector<8x128xf32>
    %288 = arith.addf %286, %287 : vector<8x128xf32>
    %c0_136 = arith.constant 0 : index
    %c0_137 = arith.constant 0 : index
    %289 = vector.load %arg11[%c0_136, %c0_137] : memref<8x128xf32, #tpu.memory_space<vmem>>, vector<8x128xf32>
    tpu.vector_store %arg11[%c0_136, %c0_137], %288 {strides = array<i32>} : memref<8x128xf32, #tpu.memory_space<vmem>>, vector<8x128xf32>,
    %290 = math.tanh %288 : vector<8x128xf32>
    %291 = arith.mulf %284, %290 : vector<8x128xf32>
    %292 = arith.truncf %291 : vector<8x128xf32> to vector<8x128xbf16>
    %c1_i32_138 = arith.constant 1 : i32
    %293 = arith.addi %c5_i32, %c1_i32_138 : i32
    %294 = arith.index_cast %293 : i32 to index
    %c0_139 = arith.constant 0 : index
    %c0_140 = arith.constant 0 : index
    %295 = vector.load %arg10[%294, %c0_139, %c0_140] : memref<9x8x128xbf16, #tpu.memory_space<vmem>>, vector<1x8x128xbf16>
    %296 = vector.shape_cast %295 : vector<1x8x128xbf16> to vector<8x128xbf16>
    %297 = vector.shape_cast %292 : vector<8x128xbf16> to vector<1x8x128xbf16>
    tpu.vector_store %arg10[%294, %c0_139, %c0_140], %297 {strides = array<i32>} : memref<9x8x128xbf16, #tpu.memory_space<vmem>>, vector<1x8x128xbf16>,
    %c6_i32 = arith.constant 6 : i32
    %298 = arith.index_cast %c6_i32 : i32 to index
    %c0_141 = arith.constant 0 : index
    %c0_142 = arith.constant 0 : index
    %299 = vector.load %arg10[%298, %c0_141, %c0_142] : memref<9x8x128xbf16, #tpu.memory_space<vmem>>, vector<1x8x128xbf16>
    %300 = vector.shape_cast %299 : vector<1x8x128xbf16> to vector<8x128xbf16>
    %301 = arith.index_cast %c6_i32 : i32 to index
    %c0_143 = arith.constant 0 : index
    %c0_144 = arith.constant 0 : index
    %302 = vector.load %arg9[%301, %c0_143, %c0_144] : memref<8x8x512xf32, #tpu.memory_space<vmem>>, vector<1x8x512xf32>
    %303 = vector.shape_cast %302 : vector<1x8x512xf32> to vector<8x512xf32>
    %cst_145 = arith.constant dense<0.000000e+00> : vector<8x512xf32>
    %304 = tpu.matmul %300, %15, %cst_145 {dimension_numbers = #tpu.dot_dimension_numbers<[1], [0], [0], [1], [0, 0, 1, 1], [], []>} : vector<8x128xbf16>, vector<128x512xbf16>, vector<8x512xf32> -> vector<8x512xf32>
    %305 = arith.addf %303, %304 : vector<8x512xf32>
    %306 = vector.extract_strided_slice %305 {offsets = [0, 0], sizes = [8, 128], strides = [1, 1]} : vector<8x512xf32> to vector<8x128xf32>
    %cst_146 = arith.constant 5.000000e-01 : f32
    %307 = vector.broadcast %cst_146 : f32 to vector<8x128xf32>
    %308 = arith.mulf %307, %306 : vector<8x128xf32>
    %309 = math.tanh %308 : vector<8x128xf32>
    %cst_147 = arith.constant 1.000000e+00 : f32
    %310 = vector.broadcast %cst_147 : f32 to vector<8x128xf32>
    %311 = arith.addf %310, %309 : vector<8x128xf32>
    %cst_148 = arith.constant 5.000000e-01 : f32
    %312 = vector.broadcast %cst_148 : f32 to vector<8x128xf32>
    %313 = arith.mulf %312, %311 : vector<8x128xf32>
    %314 = vector.extract_strided_slice %305 {offsets = [0, 128], sizes = [8, 128], strides = [1, 1]} : vector<8x512xf32> to vector<8x128xf32>
    %cst_149 = arith.constant 5.000000e-01 : f32
    %315 = vector.broadcast %cst_149 : f32 to vector<8x128xf32>
    %316 = arith.mulf %315, %314 : vector<8x128xf32>
    %317 = math.tanh %316 : vector<8x128xf32>
    %cst_150 = arith.constant 1.000000e+00 : f32
    %318 = vector.broadcast %cst_150 : f32 to vector<8x128xf32>
    %319 = arith.addf %318, %317 : vector<8x128xf32>
    %cst_151 = arith.constant 5.000000e-01 : f32
    %320 = vector.broadcast %cst_151 : f32 to vector<8x128xf32>
    %321 = arith.mulf %320, %319 : vector<8x128xf32>
    %322 = vector.extract_strided_slice %305 {offsets = [0, 256], sizes = [8, 128], strides = [1, 1]} : vector<8x512xf32> to vector<8x128xf32>
    %323 = math.tanh %322 : vector<8x128xf32>
    %324 = vector.extract_strided_slice %305 {offsets = [0, 384], sizes = [8, 128], strides = [1, 1]} : vector<8x512xf32> to vector<8x128xf32>
    %cst_152 = arith.constant 5.000000e-01 : f32
    %325 = vector.broadcast %cst_152 : f32 to vector<8x128xf32>
    %326 = arith.mulf %325, %324 : vector<8x128xf32>
    %327 = math.tanh %326 : vector<8x128xf32>
    %cst_153 = arith.constant 1.000000e+00 : f32
    %328 = vector.broadcast %cst_153 : f32 to vector<8x128xf32>
    %329 = arith.addf %328, %327 : vector<8x128xf32>
    %cst_154 = arith.constant 5.000000e-01 : f32
    %330 = vector.broadcast %cst_154 : f32 to vector<8x128xf32>
    %331 = arith.mulf %330, %329 : vector<8x128xf32>
    %c0_155 = arith.constant 0 : index
    %c0_156 = arith.constant 0 : index
    %332 = vector.load %arg11[%c0_155, %c0_156] : memref<8x128xf32, #tpu.memory_space<vmem>>, vector<8x128xf32>
    %333 = arith.mulf %321, %332 : vector<8x128xf32>
    %334 = arith.mulf %313, %323 : vector<8x128xf32>
    %335 = arith.addf %333, %334 : vector<8x128xf32>
    %c0_157 = arith.constant 0 : index
    %c0_158 = arith.constant 0 : index
    %336 = vector.load %arg11[%c0_157, %c0_158] : memref<8x128xf32, #tpu.memory_space<vmem>>, vector<8x128xf32>
    tpu.vector_store %arg11[%c0_157, %c0_158], %335 {strides = array<i32>} : memref<8x128xf32, #tpu.memory_space<vmem>>, vector<8x128xf32>,
    %337 = math.tanh %335 : vector<8x128xf32>
    %338 = arith.mulf %331, %337 : vector<8x128xf32>
    %339 = arith.truncf %338 : vector<8x128xf32> to vector<8x128xbf16>
    %c1_i32_159 = arith.constant 1 : i32
    %340 = arith.addi %c6_i32, %c1_i32_159 : i32
    %341 = arith.index_cast %340 : i32 to index
    %c0_160 = arith.constant 0 : index
    %c0_161 = arith.constant 0 : index
    %342 = vector.load %arg10[%341, %c0_160, %c0_161] : memref<9x8x128xbf16, #tpu.memory_space<vmem>>, vector<1x8x128xbf16>
    %343 = vector.shape_cast %342 : vector<1x8x128xbf16> to vector<8x128xbf16>
    %344 = vector.shape_cast %339 : vector<8x128xbf16> to vector<1x8x128xbf16>
    tpu.vector_store %arg10[%341, %c0_160, %c0_161], %344 {strides = array<i32>} : memref<9x8x128xbf16, #tpu.memory_space<vmem>>, vector<1x8x128xbf16>,
    %c7_i32 = arith.constant 7 : i32
    %345 = arith.index_cast %c7_i32 : i32 to index
    %c0_162 = arith.constant 0 : index
    %c0_163 = arith.constant 0 : index
    %346 = vector.load %arg10[%345, %c0_162, %c0_163] : memref<9x8x128xbf16, #tpu.memory_space<vmem>>, vector<1x8x128xbf16>
    %347 = vector.shape_cast %346 : vector<1x8x128xbf16> to vector<8x128xbf16>
    %348 = arith.index_cast %c7_i32 : i32 to index
    %c0_164 = arith.constant 0 : index
    %c0_165 = arith.constant 0 : index
    %349 = vector.load %arg9[%348, %c0_164, %c0_165] : memref<8x8x512xf32, #tpu.memory_space<vmem>>, vector<1x8x512xf32>
    %350 = vector.shape_cast %349 : vector<1x8x512xf32> to vector<8x512xf32>
    %cst_166 = arith.constant dense<0.000000e+00> : vector<8x512xf32>
    %351 = tpu.matmul %347, %15, %cst_166 {dimension_numbers = #tpu.dot_dimension_numbers<[1], [0], [0], [1], [0, 0, 1, 1], [], []>} : vector<8x128xbf16>, vector<128x512xbf16>, vector<8x512xf32> -> vector<8x512xf32>
    %352 = arith.addf %350, %351 : vector<8x512xf32>
    %353 = vector.extract_strided_slice %352 {offsets = [0, 0], sizes = [8, 128], strides = [1, 1]} : vector<8x512xf32> to vector<8x128xf32>
    %cst_167 = arith.constant 5.000000e-01 : f32
    %354 = vector.broadcast %cst_167 : f32 to vector<8x128xf32>
    %355 = arith.mulf %354, %353 : vector<8x128xf32>
    %356 = math.tanh %355 : vector<8x128xf32>
    %cst_168 = arith.constant 1.000000e+00 : f32
    %357 = vector.broadcast %cst_168 : f32 to vector<8x128xf32>
    %358 = arith.addf %357, %356 : vector<8x128xf32>
    %cst_169 = arith.constant 5.000000e-01 : f32
    %359 = vector.broadcast %cst_169 : f32 to vector<8x128xf32>
    %360 = arith.mulf %359, %358 : vector<8x128xf32>
    %361 = vector.extract_strided_slice %352 {offsets = [0, 128], sizes = [8, 128], strides = [1, 1]} : vector<8x512xf32> to vector<8x128xf32>
    %cst_170 = arith.constant 5.000000e-01 : f32
    %362 = vector.broadcast %cst_170 : f32 to vector<8x128xf32>
    %363 = arith.mulf %362, %361 : vector<8x128xf32>
    %364 = math.tanh %363 : vector<8x128xf32>
    %cst_171 = arith.constant 1.000000e+00 : f32
    %365 = vector.broadcast %cst_171 : f32 to vector<8x128xf32>
    %366 = arith.addf %365, %364 : vector<8x128xf32>
    %cst_172 = arith.constant 5.000000e-01 : f32
    %367 = vector.broadcast %cst_172 : f32 to vector<8x128xf32>
    %368 = arith.mulf %367, %366 : vector<8x128xf32>
    %369 = vector.extract_strided_slice %352 {offsets = [0, 256], sizes = [8, 128], strides = [1, 1]} : vector<8x512xf32> to vector<8x128xf32>
    %370 = math.tanh %369 : vector<8x128xf32>
    %371 = vector.extract_strided_slice %352 {offsets = [0, 384], sizes = [8, 128], strides = [1, 1]} : vector<8x512xf32> to vector<8x128xf32>
    %cst_173 = arith.constant 5.000000e-01 : f32
    %372 = vector.broadcast %cst_173 : f32 to vector<8x128xf32>
    %373 = arith.mulf %372, %371 : vector<8x128xf32>
    %374 = math.tanh %373 : vector<8x128xf32>
    %cst_174 = arith.constant 1.000000e+00 : f32
    %375 = vector.broadcast %cst_174 : f32 to vector<8x128xf32>
    %376 = arith.addf %375, %374 : vector<8x128xf32>
    %cst_175 = arith.constant 5.000000e-01 : f32
    %377 = vector.broadcast %cst_175 : f32 to vector<8x128xf32>
    %378 = arith.mulf %377, %376 : vector<8x128xf32>
    %c0_176 = arith.constant 0 : index
    %c0_177 = arith.constant 0 : index
    %379 = vector.load %arg11[%c0_176, %c0_177] : memref<8x128xf32, #tpu.memory_space<vmem>>, vector<8x128xf32>
    %380 = arith.mulf %368, %379 : vector<8x128xf32>
    %381 = arith.mulf %360, %370 : vector<8x128xf32>
    %382 = arith.addf %380, %381 : vector<8x128xf32>
    %c0_178 = arith.constant 0 : index
    %c0_179 = arith.constant 0 : index
    %383 = vector.load %arg11[%c0_178, %c0_179] : memref<8x128xf32, #tpu.memory_space<vmem>>, vector<8x128xf32>
    tpu.vector_store %arg11[%c0_178, %c0_179], %382 {strides = array<i32>} : memref<8x128xf32, #tpu.memory_space<vmem>>, vector<8x128xf32>,
    %384 = math.tanh %382 : vector<8x128xf32>
    %385 = arith.mulf %378, %384 : vector<8x128xf32>
    %386 = arith.truncf %385 : vector<8x128xf32> to vector<8x128xbf16>
    %c1_i32_180 = arith.constant 1 : i32
    %387 = arith.addi %c7_i32, %c1_i32_180 : i32
    %388 = arith.index_cast %387 : i32 to index
    %c0_181 = arith.constant 0 : index
    %c0_182 = arith.constant 0 : index
    %389 = vector.load %arg10[%388, %c0_181, %c0_182] : memref<9x8x128xbf16, #tpu.memory_space<vmem>>, vector<1x8x128xbf16>
    %390 = vector.shape_cast %389 : vector<1x8x128xbf16> to vector<8x128xbf16>
    %391 = vector.shape_cast %386 : vector<8x128xbf16> to vector<1x8x128xbf16>
    tpu.vector_store %arg10[%388, %c0_181, %c0_182], %391 {strides = array<i32>} : memref<9x8x128xbf16, #tpu.memory_space<vmem>>, vector<1x8x128xbf16>,
    %c8_i32 = arith.constant 8 : i32
    %c1 = arith.constant 1 : index
    %c0_183 = arith.constant 0 : index
    %c0_184 = arith.constant 0 : index
    %392 = vector.load %arg10[%c1, %c0_183, %c0_184] : memref<9x8x128xbf16, #tpu.memory_space<vmem>>, vector<8x8x128xbf16>
    %393 = vector.shape_cast %392 : vector<8x8x128xbf16> to vector<64x128xbf16>
    %c0_185 = arith.constant 0 : index
    %c0_186 = arith.constant 0 : index
    %394 = vector.load %arg6[%c0_185, %c0_186] : memref<128x128xbf16, #tpu.memory_space<vmem>>, vector<128x128xbf16>
    %cst_187 = arith.constant dense<0.000000e+00> : vector<64x128xf32>
    %395 = tpu.matmul %393, %394, %cst_187 {dimension_numbers = #tpu.dot_dimension_numbers<[1], [0], [0], [1], [0, 0, 1, 1], [], []>} : vector<64x128xbf16>, vector<128x128xbf16>, vector<64x128xf32> -> vector<64x128xf32>
    %c0_188 = arith.constant 0 : index
    %c0_189 = arith.constant 0 : index
    %396 = vector.load %arg7[%c0_188, %c0_189] : memref<1x128xf32, #tpu.memory_space<vmem>>, vector<1x128xf32>
    %397 = vector.broadcast %396 : vector<1x128xf32> to vector<64x128xf32>
    %398 = arith.addf %395, %397 : vector<64x128xf32>
    %399 = vector.shape_cast %398 : vector<64x128xf32> to vector<8x8x128xf32>
    %c0_190 = arith.constant 0 : index
    %c0_191 = arith.constant 0 : index
    %c0_192 = arith.constant 0 : index
    %400 = vector.load %arg8[%c0_190, %c0_191, %c0_192] : memref<8x8x128xf32, #tpu.memory_space<vmem>>, vector<8x8x128xf32>
    tpu.vector_store %arg8[%c0_190, %c0_191, %c0_192], %399 {strides = array<i32>} : memref<8x8x128xf32, #tpu.memory_space<vmem>>, vector<8x8x128xf32>,
    return
  }
  func.func @transform_0(%arg0: i32, %arg1: i32) -> (i32, i32, i32) {
    %c0_i32 = arith.constant 0 : i32
    %c0_i32_0 = arith.constant 0 : i32
    return %arg1, %arg0, %c0_i32 : i32, i32, i32
  }
  func.func @transform_1(%arg0: i32, %arg1: i32) -> (i32, i32) {
    %c0_i32 = arith.constant 0 : i32
    %c0_i32_0 = arith.constant 0 : i32
    %c0_i32_1 = arith.constant 0 : i32
    return %c0_i32, %c0_i32_0 : i32, i32
  }
  func.func @transform_2(%arg0: i32, %arg1: i32) -> (i32, i32) {
    %c0_i32 = arith.constant 0 : i32
    %c0_i32_0 = arith.constant 0 : i32
    %c0_i32_1 = arith.constant 0 : i32
    return %c0_i32, %c0_i32_0 : i32, i32
  }
  func.func @transform_3(%arg0: i32, %arg1: i32) -> (i32, i32) {
    %c0_i32 = arith.constant 0 : i32
    %c0_i32_0 = arith.constant 0 : i32
    %c0_i32_1 = arith.constant 0 : i32
    return %c0_i32, %c0_i32_0 : i32, i32
  }
  func.func @transform_4(%arg0: i32, %arg1: i32) -> (i32, i32) {
    %c0_i32 = arith.constant 0 : i32
    %c0_i32_0 = arith.constant 0 : i32
    %c0_i32_1 = arith.constant 0 : i32
    return %c0_i32, %c0_i32_0 : i32, i32
  }
  func.func @transform_5(%arg0: i32, %arg1: i32) -> (i32, i32) {
    %c0_i32 = arith.constant 0 : i32
    %c0_i32_0 = arith.constant 0 : i32
    %c0_i32_1 = arith.constant 0 : i32
    return %c0_i32, %c0_i32_0 : i32, i32
  }
  func.func @transform_6(%arg0: i32, %arg1: i32) -> (i32, i32, i32) {
    %c0_i32 = arith.constant 0 : i32
    %c0_i32_0 = arith.constant 0 : i32
    return %arg1, %arg0, %c0_i32 : i32, i32, i32
  }
}

</mosaic_0001>

<llo_original>
// kernel: simple_lstm_forward.1
$region0: #{simple_lstm_forward.1}
  #allocation0 [shape = 'u32[]', space=smem, size = 0x4, offset = 0x4, fixed_abs, tag = 'smem constant byte address 0x4 - core index']
  #allocation1 [shape = 'u32[144,128]{1,0:T(1,128)}', space=vmem, size = 0x12000, scoped, tag = 'internal scratch']
  #allocation2 [shape = 'f32[8,8,512]{2,1,0:T(8,128)}', space=vmem, size = 0x20000, scoped, tag = 'scratch operand']
  #allocation3 [shape = 'bf16[9,8,128]{2,1,0:T(8,128)(2,1)}', space=vmem, size = 0x4800, scoped, tag = 'scratch operand']
  #allocation4 [shape = 'f32[8,128]{1,0:T(8,128)}', space=vmem, size = 0x1000, scoped, tag = 'scratch operand']
  %s0 = inlined_call_operand.vmem [shape: bf16[8,8,128], index: 0, kind: input, shape index: {}]
  %s1 = inlined_call_operand.vmem [shape: bf16[128,512], index: 1, kind: input, shape index: {}]
  %s2 = inlined_call_operand.vmem [shape: f32[1,512], index: 2, kind: input, shape index: {}]
  %s3 = inlined_call_operand.vmem [shape: bf16[128,512], index: 3, kind: input, shape index: {}]
  %s4 = inlined_call_operand.vmem [shape: bf16[128,128], index: 4, kind: input, shape index: {}]
  %s5 = inlined_call_operand.vmem [shape: f32[1,128], index: 5, kind: input, shape index: {}]
  %s6 = inlined_call_operand.vmem [shape: f32[8,8,128], index: 6, kind: output, shape index: {}]
  %s7 = sld [smem:[#allocation0]]
  $region42: #{simple_lstm_forward.1} parent=0
    _
  %s9 = ssub.s32 1, %s7
  %s10 = scalar_select 0, %s9, %s7
  // Predicated region
  $region2: #{simple_lstm_forward.1} parent=0 // pred_check
    _
  $region3: #{simple_lstm_forward.1} parent=0 // pred_check_branch
    %12 = sbr.rel (0) target = $region5
  $region4: #{simple_lstm_forward.1} parent=0 // pred_region
    _
  $region5: #{simple_lstm_forward.1} parent=0 // pred_fallthru
    _
  // Predicated region
  $region6: #{simple_lstm_forward.1} parent=0 // pred_check
    _
  $region7: #{simple_lstm_forward.1} parent=0 // pred_check_branch
    %14 = sbr.rel (0) target = $region9
  $region8: #{simple_lstm_forward.1} parent=0 // pred_region
    _
  $region9: #{simple_lstm_forward.1} parent=0 // pred_fallthru
    _
  // Predicated region
  $region10: #{simple_lstm_forward.1} parent=0 // pred_check
    _
  $region11: #{simple_lstm_forward.1} parent=0 // pred_check_branch
    %16 = sbr.rel (0) target = $region13
  $region12: #{simple_lstm_forward.1} parent=0 // pred_region
    _
  $region13: #{simple_lstm_forward.1} parent=0 // pred_fallthru
    _
  // Predicated region
  $region14: #{simple_lstm_forward.1} parent=0 // pred_check
    _
  $region15: #{simple_lstm_forward.1} parent=0 // pred_check_branch
    %18 = sbr.rel (0) target = $region17
  $region16: #{simple_lstm_forward.1} parent=0 // pred_region
    _
  $region17: #{simple_lstm_forward.1} parent=0 // pred_fallthru
    _
  // Predicated region
  $region18: #{simple_lstm_forward.1} parent=0 // pred_check
    _
  $region19: #{simple_lstm_forward.1} parent=0 // pred_check_branch
    %20 = sbr.rel (0) target = $region21
  $region20: #{simple_lstm_forward.1} parent=0 // pred_region
    _
  $region21: #{simple_lstm_forward.1} parent=0 // pred_fallthru
    _
  // Predicated region
  $region22: #{simple_lstm_forward.1} parent=0 // pred_check
    _
  $region23: #{simple_lstm_forward.1} parent=0 // pred_check_branch
    %22 = sbr.rel (0) target = $region25
  $region24: #{simple_lstm_forward.1} parent=0 // pred_region
    _
  $region25: #{simple_lstm_forward.1} parent=0 // pred_fallthru
    _
  %p24 = scmp.eq.s32.totalorder 0, 0
  // Predicated region
  $region26: #{simple_lstm_forward.1} parent=0 // pred_check
    %p25 = pneg %p24
  $region27: #{simple_lstm_forward.1} parent=0 // pred_check_branch
    %27 = sbr.rel (%p25) target = $region29
  $region28: #{simple_lstm_forward.1} parent=0 // pred_region
    %28 = vst [vmem:[#allocation3] sm:$0xf] 0
    %29 = vst [vmem:[#allocation4] sm:$0xff] 0.0
  $region29: #{simple_lstm_forward.1} parent=0 // pred_fallthru
    _
  %p30 = scmp.ne.s32.totalorder 0, 0
  // Predicated region
  $region30: #{simple_lstm_forward.1} parent=0 // pred_check
    %p31 = pneg %p30
  $region31: #{simple_lstm_forward.1} parent=0 // pred_check_branch
    %33 = sbr.rel (%p31) target = $region33
  $region32: #{simple_lstm_forward.1} parent=0 // pred_region
    %s34 = scalar_lea.vmem [#allocation3], 32
    %v35 = vld [vmem:[%s34] sm:$0xf]
    %36 = vst [vmem:[#allocation3] sm:$0xf] %v35
  $region33: #{simple_lstm_forward.1} parent=0 // pred_fallthru
    _
  %v37 = vld [vmem:[%s0] sm:$0xf]
  %v38 = vld [vmem:[%s0 + $0x4] sm:$0xf]
  %v39 = vld [vmem:[%s0 + $0x8] sm:$0xf]
  %v40 = vld [vmem:[%s0 + $0xc] sm:$0xf]
  %v41 = vld [vmem:[%s0 + $0x10] sm:$0xf]
  %v42 = vld [vmem:[%s0 + $0x14] sm:$0xf]
  %v43 = vld [vmem:[%s0 + $0x18] sm:$0xf]
  %v44 = vld [vmem:[%s0 + $0x1c] sm:$0xf]
  %v45 = vld [vmem:[%s1] sm:$0xff]
  %v46 = vld [vmem:[%s1 + $0x8] sm:$0xff]
  %v47 = vld [vmem:[%s1 + $0x10] sm:$0xff]
  %v48 = vld [vmem:[%s1 + $0x18] sm:$0xff]
  %v49 = vld [vmem:[%s1 + $0x20] sm:$0xff]
  %v50 = vld [vmem:[%s1 + $0x28] sm:$0xff]
  %v51 = vld [vmem:[%s1 + $0x30] sm:$0xff]
  %v52 = vld [vmem:[%s1 + $0x38] sm:$0xff]
  %v53 = vld [vmem:[%s1 + $0x40] sm:$0xff]
  %v54 = vld [vmem:[%s1 + $0x48] sm:$0xff]
  %v55 = vld [vmem:[%s1 + $0x50] sm:$0xff]
  %v56 = vld [vmem:[%s1 + $0x58] sm:$0xff]
  %v57 = vld [vmem:[%s1 + $0x60] sm:$0xff]
  %v58 = vld [vmem:[%s1 + $0x68] sm:$0xff]
  %v59 = vld [vmem:[%s1 + $0x70] sm:$0xff]
  %v60 = vld [vmem:[%s1 + $0x78] sm:$0xff]
  %v61 = vld [vmem:[%s1 + $0x80] sm:$0xff]
  %v62 = vld [vmem:[%s1 + $0x88] sm:$0xff]
  %v63 = vld [vmem:[%s1 + $0x90] sm:$0xff]
  %v64 = vld [vmem:[%s1 + $0x98] sm:$0xff]
  %v65 = vld [vmem:[%s1 + $0xa0] sm:$0xff]
  %v66 = vld [vmem:[%s1 + $0xa8] sm:$0xff]
  %v67 = vld [vmem:[%s1 + $0xb0] sm:$0xff]
  %v68 = vld [vmem:[%s1 + $0xb8] sm:$0xff]
  %v69 = vld [vmem:[%s1 + $0xc0] sm:$0xff]
  %v70 = vld [vmem:[%s1 + $0xc8] sm:$0xff]
  %v71 = vld [vmem:[%s1 + $0xd0] sm:$0xff]
  %v72 = vld [vmem:[%s1 + $0xd8] sm:$0xff]
  %v73 = vld [vmem:[%s1 + $0xe0] sm:$0xff]
  %v74 = vld [vmem:[%s1 + $0xe8] sm:$0xff]
  %v75 = vld [vmem:[%s1 + $0xf0] sm:$0xff]
  %v76 = vld [vmem:[%s1 + $0xf8] sm:$0xff]
  %v77 = vld [vmem:[%s2] sm:$0xf]
  %v79 = vlaneseq
  %v80 = vshrl.u32 %v79, 7
  %v81 = vsub.s32 0, %v80
  %v82 = vrot.slane %v77, %v81
  %v83 = vlaneseq
  %v84 = vshrl.u32 %v83, 7
  %v85 = vsub.s32 1, %v84
  %v86 = vrot.slane %v77, %v85
  %v87 = vlaneseq
  %v88 = vshrl.u32 %v87, 7
  %v89 = vsub.s32 2, %v88
  %v90 = vrot.slane %v77, %v89
  %v91 = vlaneseq
  %v92 = vshrl.u32 %v91, 7
  %v93 = vsub.s32 3, %v92
  %v94 = vrot.slane %v77, %v93
  %v107 = vunpack.c.l.b16 %v37
  %v108 = vunpack.c.l.b16 %v38
  %v109 = vunpack.c.l.b16 %v39
  %v110 = vunpack.c.l.b16 %v40
  %v111 = vunpack.c.l.b16 %v41
  %v112 = vunpack.c.l.b16 %v42
  %v113 = vunpack.c.l.b16 %v43
  %v114 = vunpack.c.l.b16 %v44
  %v115 = vpack.c.b16 %v108, %v107
  %v116 = vpack.c.b16 %v110, %v109
  %v117 = vpack.c.b16 %v112, %v111
  %v118 = vpack.c.b16 %v114, %v113
  %v155 = vunpack.c.l.b16 %v45
  %v156 = vunpack.c.h.b16 %v45
  %v157 = vunpack.c.l.b16 %v46
  %v158 = vunpack.c.h.b16 %v46
  %v159 = vunpack.c.l.b16 %v47
  %v160 = vunpack.c.h.b16 %v47
  %v161 = vunpack.c.l.b16 %v48
  %v162 = vunpack.c.h.b16 %v48
  %v163 = vunpack.c.l.b16 %v49
  %v164 = vunpack.c.h.b16 %v49
  %v165 = vunpack.c.l.b16 %v50
  %v166 = vunpack.c.h.b16 %v50
  %v167 = vunpack.c.l.b16 %v51
  %v168 = vunpack.c.h.b16 %v51
  %v169 = vunpack.c.l.b16 %v52
  %v170 = vunpack.c.h.b16 %v52
  %v171 = vunpack.c.l.b16 %v53
  %v172 = vunpack.c.h.b16 %v53
  %v173 = vunpack.c.l.b16 %v54
  %v174 = vunpack.c.h.b16 %v54
  %v175 = vunpack.c.l.b16 %v55
  %v176 = vunpack.c.h.b16 %v55
  %v177 = vunpack.c.l.b16 %v56
  %v178 = vunpack.c.h.b16 %v56
  %v179 = vunpack.c.l.b16 %v57
  %v180 = vunpack.c.h.b16 %v57
  %v181 = vunpack.c.l.b16 %v58
  %v182 = vunpack.c.h.b16 %v58
  %v183 = vunpack.c.l.b16 %v59
  %v184 = vunpack.c.h.b16 %v59
  %v185 = vunpack.c.l.b16 %v60
  %v186 = vunpack.c.h.b16 %v60
  %v187 = vunpack.c.l.b16 %v61
  %v188 = vunpack.c.h.b16 %v61
  %v189 = vunpack.c.l.b16 %v62
  %v190 = vunpack.c.h.b16 %v62
  %v191 = vunpack.c.l.b16 %v63
  %v192 = vunpack.c.h.b16 %v63
  %v193 = vunpack.c.l.b16 %v64
  %v194 = vunpack.c.h.b16 %v64
  %v195 = vunpack.c.l.b16 %v65
  %v196 = vunpack.c.h.b16 %v65
  %v197 = vunpack.c.l.b16 %v66
  %v198 = vunpack.c.h.b16 %v66
  %v199 = vunpack.c.l.b16 %v67
  %v200 = vunpack.c.h.b16 %v67
  %v201 = vunpack.c.l.b16 %v68
  %v202 = vunpack.c.h.b16 %v68
  %v203 = vunpack.c.l.b16 %v69
  %v204 = vunpack.c.h.b16 %v69
  %v205 = vunpack.c.l.b16 %v70
  %v206 = vunpack.c.h.b16 %v70
  %v207 = vunpack.c.l.b16 %v71
  %v208 = vunpack.c.h.b16 %v71
  %v209 = vunpack.c.l.b16 %v72
  %v210 = vunpack.c.h.b16 %v72
  %v211 = vunpack.c.l.b16 %v73
  %v212 = vunpack.c.h.b16 %v73
  %v213 = vunpack.c.l.b16 %v74
  %v214 = vunpack.c.h.b16 %v74
  %v215 = vunpack.c.l.b16 %v75
  %v216 = vunpack.c.h.b16 %v75
  %v217 = vunpack.c.l.b16 %v76
  %v218 = vunpack.c.h.b16 %v76
  %v219 = vpack.c.b16 %v159, %v155
  %v220 = vpack.c.b16 %v160, %v156
  %v221 = vpack.c.b16 %v161, %v157
  %v222 = vpack.c.b16 %v162, %v158
  %v223 = vpack.c.b16 %v167, %v163
  %v224 = vpack.c.b16 %v168, %v164
  %v225 = vpack.c.b16 %v169, %v165
  %v226 = vpack.c.b16 %v170, %v166
  %v227 = vpack.c.b16 %v175, %v171
  %v228 = vpack.c.b16 %v176, %v172
  %v229 = vpack.c.b16 %v177, %v173
  %v230 = vpack.c.b16 %v178, %v174
  %v231 = vpack.c.b16 %v183, %v179
  %v232 = vpack.c.b16 %v184, %v180
  %v233 = vpack.c.b16 %v185, %v181
  %v234 = vpack.c.b16 %v186, %v182
  %v235 = vpack.c.b16 %v191, %v187
  %v236 = vpack.c.b16 %v192, %v188
  %v237 = vpack.c.b16 %v193, %v189
  %v238 = vpack.c.b16 %v194, %v190
  %v239 = vpack.c.b16 %v199, %v195
  %v240 = vpack.c.b16 %v200, %v196
  %v241 = vpack.c.b16 %v201, %v197
  %v242 = vpack.c.b16 %v202, %v198
  %v243 = vpack.c.b16 %v207, %v203
  %v244 = vpack.c.b16 %v208, %v204
  %v245 = vpack.c.b16 %v209, %v205
  %v246 = vpack.c.b16 %v210, %v206
  %v247 = vpack.c.b16 %v215, %v211
  %v248 = vpack.c.b16 %v216, %v212
  %v249 = vpack.c.b16 %v217, %v213
  %v250 = vpack.c.b16 %v218, %v214
  %283 = vmatprep.subr.bf16.mxu0 %v248
  %284 = vmatpush1.bf16.msra.mxu0 %v247
  %285 = vmatprep.subr.bf16.mxu0 %v244
  %286 = vmatpush1.bf16.msra.mxu0 %v243
  %287 = vmatprep.subr.bf16.mxu0 %v240
  %288 = vmatpush1.bf16.msra.mxu0 %v239
  %289 = vmatprep.subr.bf16.mxu0 %v236
  %290 = vmatpush1.bf16.msra.mxu0 %v235
  %291 = vmatprep.subr.bf16.mxu0 %v232
  %292 = vmatpush1.bf16.msra.mxu0 %v231
  %293 = vmatprep.subr.bf16.mxu0 %v228
  %294 = vmatpush1.bf16.msra.mxu0 %v227
  %295 = vmatprep.subr.bf16.mxu0 %v224
  %296 = vmatpush1.bf16.msra.mxu0 %v223
  %297 = vmatprep.subr.bf16.mxu0 %v220
  %298 = vmatpush1.bf16.msra.mxu0 %v219
  %299 = vmatprep.subr.bf16.mxu0 0
  %300 = vmatpush2.bf16.msra.mxu0 0
  %301 = vmatprep.subr.bf16.mxu0 0
  %302 = vmatpush2.bf16.msra.mxu0 0
  %303 = vmatprep.subr.bf16.mxu0 0
  %304 = vmatpush2.bf16.msra.mxu0 0
  %305 = vmatprep.subr.bf16.mxu0 0
  %306 = vmatpush2.bf16.msra.mxu0 0
  %307 = vmatprep.subr.bf16.mxu0 0
  %308 = vmatpush2.bf16.msra.mxu0 0
  %309 = vmatprep.subr.bf16.mxu0 0
  %310 = vmatpush2.bf16.msra.mxu0 0
  %311 = vmatprep.subr.bf16.mxu0 0
  %312 = vmatpush2.bf16.msra.mxu0 0
  %313 = vmatprep.subr.bf16.mxu0 0
  %314 = vmatpush2.bf16.msra.mxu0 0
  %315 = vmatprep.mubr.bf16.mxu0 0
  %316 = vmatmul.mubr.bf16.gmra.mxu0 %v115
  %v317 = vpop.f32.mrf.mxu0
  %v318 = vadd.f32 %v82, %v317
  %v319 = vpop.f32.mrf.mxu0
  %v320 = vadd.f32 %v86, %v319
  %v321 = vpop.f32.mrf.mxu0
  %v322 = vadd.f32 %v82, %v321
  %v323 = vpop.f32.mrf.mxu0
  %v324 = vadd.f32 %v86, %v323
  %325 = vmatprep.mubr.bf16.mxu0 0
  %326 = vmatmul.mubr.bf16.gmra.mxu0 %v116
  %v327 = vpop.f32.mrf.mxu0
  %v328 = vadd.f32 %v82, %v327
  %v329 = vpop.f32.mrf.mxu0
  %v330 = vadd.f32 %v86, %v329
  %v331 = vpop.f32.mrf.mxu0
  %v332 = vadd.f32 %v82, %v331
  %v333 = vpop.f32.mrf.mxu0
  %v334 = vadd.f32 %v86, %v333
  %335 = vmatprep.mubr.bf16.mxu0 0
  %336 = vmatmul.mubr.bf16.gmra.mxu0 %v117
  %v337 = vpop.f32.mrf.mxu0
  %v338 = vadd.f32 %v82, %v337
  %v339 = vpop.f32.mrf.mxu0
  %v340 = vadd.f32 %v86, %v339
  %v341 = vpop.f32.mrf.mxu0
  %v342 = vadd.f32 %v82, %v341
  %v343 = vpop.f32.mrf.mxu0
  %v344 = vadd.f32 %v86, %v343
  %345 = vmatprep.mubr.bf16.mxu0 0
  %346 = vmatmul.mubr.bf16.gmra.mxu0 %v118
  %v347 = vpop.f32.mrf.mxu0
  %v348 = vadd.f32 %v82, %v347
  %v349 = vpop.f32.mrf.mxu0
  %v350 = vadd.f32 %v86, %v349
  %v351 = vpop.f32.mrf.mxu0
  %v352 = vadd.f32 %v82, %v351
  %v353 = vpop.f32.mrf.mxu0
  %v354 = vadd.f32 %v86, %v353
  %355 = vdwg.mxu0
  %356 = vmatprep.subr.bf16.mxu0 %v250
  %357 = vmatpush1.bf16.msra.mxu0 %v249
  %358 = vmatprep.subr.bf16.mxu0 %v246
  %359 = vmatpush1.bf16.msra.mxu0 %v245
  %360 = vmatprep.subr.bf16.mxu0 %v242
  %361 = vmatpush1.bf16.msra.mxu0 %v241
  %362 = vmatprep.subr.bf16.mxu0 %v238
  %363 = vmatpush1.bf16.msra.mxu0 %v237
  %364 = vmatprep.subr.bf16.mxu0 %v234
  %365 = vmatpush1.bf16.msra.mxu0 %v233
  %366 = vmatprep.subr.bf16.mxu0 %v230
  %367 = vmatpush1.bf16.msra.mxu0 %v229
  %368 = vmatprep.subr.bf16.mxu0 %v226
  %369 = vmatpush1.bf16.msra.mxu0 %v225
  %370 = vmatprep.subr.bf16.mxu0 %v222
  %371 = vmatpush1.bf16.msra.mxu0 %v221
  %372 = vmatprep.subr.bf16.mxu0 0
  %373 = vmatpush2.bf16.msra.mxu0 0
  %374 = vmatprep.subr.bf16.mxu0 0
  %375 = vmatpush2.bf16.msra.mxu0 0
  %376 = vmatprep.subr.bf16.mxu0 0
  %377 = vmatpush2.bf16.msra.mxu0 0
  %378 = vmatprep.subr.bf16.mxu0 0
  %379 = vmatpush2.bf16.msra.mxu0 0
  %380 = vmatprep.subr.bf16.mxu0 0
  %381 = vmatpush2.bf16.msra.mxu0 0
  %382 = vmatprep.subr.bf16.mxu0 0
  %383 = vmatpush2.bf16.msra.mxu0 0
  %384 = vmatprep.subr.bf16.mxu0 0
  %385 = vmatpush2.bf16.msra.mxu0 0
  %386 = vmatprep.subr.bf16.mxu0 0
  %387 = vmatpush2.bf16.msra.mxu0 0
  %388 = vmatprep.mubr.bf16.mxu0 0
  %389 = vmatmul.mubr.bf16.gmra.mxu0 %v115
  %v390 = vpop.f32.mrf.mxu0
  %v391 = vadd.f32 %v90, %v390
  %v392 = vpop.f32.mrf.mxu0
  %v393 = vadd.f32 %v94, %v392
  %v394 = vpop.f32.mrf.mxu0
  %v395 = vadd.f32 %v90, %v394
  %v396 = vpop.f32.mrf.mxu0
  %v397 = vadd.f32 %v94, %v396
  %398 = vmatprep.mubr.bf16.mxu0 0
  %399 = vmatmul.mubr.bf16.gmra.mxu0 %v116
  %v400 = vpop.f32.mrf.mxu0
  %v401 = vadd.f32 %v90, %v400
  %v402 = vpop.f32.mrf.mxu0
  %v403 = vadd.f32 %v94, %v402
  %v404 = vpop.f32.mrf.mxu0
  %v405 = vadd.f32 %v90, %v404
  %v406 = vpop.f32.mrf.mxu0
  %v407 = vadd.f32 %v94, %v406
  %408 = vmatprep.mubr.bf16.mxu0 0
  %409 = vmatmul.mubr.bf16.gmra.mxu0 %v117
  %v410 = vpop.f32.mrf.mxu0
  %v411 = vadd.f32 %v90, %v410
  %v412 = vpop.f32.mrf.mxu0
  %v413 = vadd.f32 %v94, %v412
  %v414 = vpop.f32.mrf.mxu0
  %v415 = vadd.f32 %v90, %v414
  %v416 = vpop.f32.mrf.mxu0
  %v417 = vadd.f32 %v94, %v416
  %418 = vmatprep.mubr.bf16.mxu0 0
  %419 = vmatmul.mubr.bf16.gmra.mxu0 %v118
  %v420 = vpop.f32.mrf.mxu0
  %v421 = vadd.f32 %v90, %v420
  %v422 = vpop.f32.mrf.mxu0
  %v423 = vadd.f32 %v94, %v422
  %v424 = vpop.f32.mrf.mxu0
  %v425 = vadd.f32 %v90, %v424
  %v426 = vpop.f32.mrf.mxu0
  %v427 = vadd.f32 %v94, %v426
  %428 = vdwg.mxu0
  %429 = vst [vmem:[#allocation2] sm:$0xff] %v318
  %430 = vst [vmem:[#allocation2 + $0x8] sm:$0xff] %v320
  %431 = vst [vmem:[#allocation2 + $0x10] sm:$0xff] %v391
  %432 = vst [vmem:[#allocation2 + $0x18] sm:$0xff] %v393
  %433 = vst [vmem:[#allocation2 + $0x20] sm:$0xff] %v322
  %434 = vst [vmem:[#allocation2 + $0x28] sm:$0xff] %v324
  %435 = vst [vmem:[#allocation2 + $0x30] sm:$0xff] %v395
  %436 = vst [vmem:[#allocation2 + $0x38] sm:$0xff] %v397
  %437 = vst [vmem:[#allocation2 + $0x40] sm:$0xff] %v328
  %438 = vst [vmem:[#allocation2 + $0x48] sm:$0xff] %v330
  %439 = vst [vmem:[#allocation2 + $0x50] sm:$0xff] %v401
  %440 = vst [vmem:[#allocation2 + $0x58] sm:$0xff] %v403
  %441 = vst [vmem:[#allocation2 + $0x60] sm:$0xff] %v332
  %442 = vst [vmem:[#allocation2 + $0x68] sm:$0xff] %v334
  %443 = vst [vmem:[#allocation2 + $0x70] sm:$0xff] %v405
  %444 = vst [vmem:[#allocation2 + $0x78] sm:$0xff] %v407
  %445 = vst [vmem:[#allocation2 + $0x80] sm:$0xff] %v338
  %446 = vst [vmem:[#allocation2 + $0x88] sm:$0xff] %v340
  %447 = vst [vmem:[#allocation2 + $0x90] sm:$0xff] %v411
  %448 = vst [vmem:[#allocation2 + $0x98] sm:$0xff] %v413
  %449 = vst [vmem:[#allocation2 + $0xa0] sm:$0xff] %v342
  %450 = vst [vmem:[#allocation2 + $0xa8] sm:$0xff] %v344
  %451 = vst [vmem:[#allocation2 + $0xb0] sm:$0xff] %v415
  %452 = vst [vmem:[#allocation2 + $0xb8] sm:$0xff] %v417
  %453 = vst [vmem:[#allocation2 + $0xc0] sm:$0xff] %v348
  %454 = vst [vmem:[#allocation2 + $0xc8] sm:$0xff] %v350
  %455 = vst [vmem:[#allocation2 + $0xd0] sm:$0xff] %v421
  %456 = vst [vmem:[#allocation2 + $0xd8] sm:$0xff] %v423
  %457 = vst [vmem:[#allocation2 + $0xe0] sm:$0xff] %v352
  %458 = vst [vmem:[#allocation2 + $0xe8] sm:$0xff] %v354
  %459 = vst [vmem:[#allocation2 + $0xf0] sm:$0xff] %v425
  %460 = vst [vmem:[#allocation2 + $0xf8] sm:$0xff] %v427
  %v461 = vld [vmem:[%s3] sm:$0xff]
  %v462 = vld [vmem:[%s3 + $0x8] sm:$0xff]
  %v463 = vld [vmem:[%s3 + $0x10] sm:$0xff]
  %v464 = vld [vmem:[%s3 + $0x18] sm:$0xff]
  %v465 = vld [vmem:[%s3 + $0x20] sm:$0xff]
  %v466 = vld [vmem:[%s3 + $0x28] sm:$0xff]
  %v467 = vld [vmem:[%s3 + $0x30] sm:$0xff]
  %v468 = vld [vmem:[%s3 + $0x38] sm:$0xff]
  %v469 = vld [vmem:[%s3 + $0x40] sm:$0xff]
  %v470 = vld [vmem:[%s3 + $0x48] sm:$0xff]
  %v471 = vld [vmem:[%s3 + $0x50] sm:$0xff]
  %v472 = vld [vmem:[%s3 + $0x58] sm:$0xff]
  %v473 = vld [vmem:[%s3 + $0x60] sm:$0xff]
  %v474 = vld [vmem:[%s3 + $0x68] sm:$0xff]
  %v475 = vld [vmem:[%s3 + $0x70] sm:$0xff]
  %v476 = vld [vmem:[%s3 + $0x78] sm:$0xff]
  %v477 = vld [vmem:[%s3 + $0x80] sm:$0xff]
  %v478 = vld [vmem:[%s3 + $0x88] sm:$0xff]
  %v479 = vld [vmem:[%s3 + $0x90] sm:$0xff]
  %v480 = vld [vmem:[%s3 + $0x98] sm:$0xff]
  %v481 = vld [vmem:[%s3 + $0xa0] sm:$0xff]
  %v482 = vld [vmem:[%s3 + $0xa8] sm:$0xff]
  %v483 = vld [vmem:[%s3 + $0xb0] sm:$0xff]
  %v484 = vld [vmem:[%s3 + $0xb8] sm:$0xff]
  %v485 = vld [vmem:[%s3 + $0xc0] sm:$0xff]
  %v486 = vld [vmem:[%s3 + $0xc8] sm:$0xff]
  %v487 = vld [vmem:[%s3 + $0xd0] sm:$0xff]
  %v488 = vld [vmem:[%s3 + $0xd8] sm:$0xff]
  %v489 = vld [vmem:[%s3 + $0xe0] sm:$0xff]
  %v490 = vld [vmem:[%s3 + $0xe8] sm:$0xff]
  %v491 = vld [vmem:[%s3 + $0xf0] sm:$0xff]
  %v492 = vld [vmem:[%s3 + $0xf8] sm:$0xff]
  %v493 = vld [vmem:[#allocation3] sm:$0xf]
  %v494 = vld [vmem:[#allocation2] sm:$0xff]
  %v495 = vld [vmem:[#allocation2 + $0x8] sm:$0xff]
  %v496 = vld [vmem:[#allocation2 + $0x10] sm:$0xff]
  %v497 = vld [vmem:[#allocation2 + $0x18] sm:$0xff]
  %v530 = vunpack.c.l.b16 %v461
  %v531 = vunpack.c.h.b16 %v461
  %v532 = vunpack.c.l.b16 %v462
  %v533 = vunpack.c.h.b16 %v462
  %v534 = vunpack.c.l.b16 %v463
  %v535 = vunpack.c.h.b16 %v463
  %v536 = vunpack.c.l.b16 %v464
  %v537 = vunpack.c.h.b16 %v464
  %v538 = vunpack.c.l.b16 %v465
  %v539 = vunpack.c.h.b16 %v465
  %v540 = vunpack.c.l.b16 %v466
  %v541 = vunpack.c.h.b16 %v466
  %v542 = vunpack.c.l.b16 %v467
  %v543 = vunpack.c.h.b16 %v467
  %v544 = vunpack.c.l.b16 %v468
  %v545 = vunpack.c.h.b16 %v468
  %v546 = vunpack.c.l.b16 %v469
  %v547 = vunpack.c.h.b16 %v469
  %v548 = vunpack.c.l.b16 %v470
  %v549 = vunpack.c.h.b16 %v470
  %v550 = vunpack.c.l.b16 %v471
  %v551 = vunpack.c.h.b16 %v471
  %v552 = vunpack.c.l.b16 %v472
  %v553 = vunpack.c.h.b16 %v472
  %v554 = vunpack.c.l.b16 %v473
  %v555 = vunpack.c.h.b16 %v473
  %v556 = vunpack.c.l.b16 %v474
  %v557 = vunpack.c.h.b16 %v474
  %v558 = vunpack.c.l.b16 %v475
  %v559 = vunpack.c.h.b16 %v475
  %v560 = vunpack.c.l.b16 %v476
  %v561 = vunpack.c.h.b16 %v476
  %v562 = vunpack.c.l.b16 %v477
  %v563 = vunpack.c.h.b16 %v477
  %v564 = vunpack.c.l.b16 %v478
  %v565 = vunpack.c.h.b16 %v478
  %v566 = vunpack.c.l.b16 %v479
  %v567 = vunpack.c.h.b16 %v479
  %v568 = vunpack.c.l.b16 %v480
  %v569 = vunpack.c.h.b16 %v480
  %v570 = vunpack.c.l.b16 %v481
  %v571 = vunpack.c.h.b16 %v481
  %v572 = vunpack.c.l.b16 %v482
  %v573 = vunpack.c.h.b16 %v482
  %v574 = vunpack.c.l.b16 %v483
  %v575 = vunpack.c.h.b16 %v483
  %v576 = vunpack.c.l.b16 %v484
  %v577 = vunpack.c.h.b16 %v484
  %v578 = vunpack.c.l.b16 %v485
  %v579 = vunpack.c.h.b16 %v485
  %v580 = vunpack.c.l.b16 %v486
  %v581 = vunpack.c.h.b16 %v486
  %v582 = vunpack.c.l.b16 %v487
  %v583 = vunpack.c.h.b16 %v487
  %v584 = vunpack.c.l.b16 %v488
  %v585 = vunpack.c.h.b16 %v488
  %v586 = vunpack.c.l.b16 %v489
  %v587 = vunpack.c.h.b16 %v489
  %v588 = vunpack.c.l.b16 %v490
  %v589 = vunpack.c.h.b16 %v490
  %v590 = vunpack.c.l.b16 %v491
  %v591 = vunpack.c.h.b16 %v491
  %v592 = vunpack.c.l.b16 %v492
  %v593 = vunpack.c.h.b16 %v492
  %v594 = vpack.c.b16 %v534, %v530
  %v595 = vpack.c.b16 %v535, %v531
  %v596 = vpack.c.b16 %v536, %v532
  %v597 = vpack.c.b16 %v537, %v533
  %v598 = vpack.c.b16 %v542, %v538
  %v599 = vpack.c.b16 %v543, %v539
  %v600 = vpack.c.b16 %v544, %v540
  %v601 = vpack.c.b16 %v545, %v541
  %v602 = vpack.c.b16 %v550, %v546
  %v603 = vpack.c.b16 %v551, %v547
  %v604 = vpack.c.b16 %v552, %v548
  %v605 = vpack.c.b16 %v553, %v549
  %v606 = vpack.c.b16 %v558, %v554
  %v607 = vpack.c.b16 %v559, %v555
  %v608 = vpack.c.b16 %v560, %v556
  %v609 = vpack.c.b16 %v561, %v557
  %v610 = vpack.c.b16 %v566, %v562
  %v611 = vpack.c.b16 %v567, %v563
  %v612 = vpack.c.b16 %v568, %v564
  %v613 = vpack.c.b16 %v569, %v565
  %v614 = vpack.c.b16 %v574, %v570
  %v615 = vpack.c.b16 %v575, %v571
  %v616 = vpack.c.b16 %v576, %v572
  %v617 = vpack.c.b16 %v577, %v573
  %v618 = vpack.c.b16 %v582, %v578
  %v619 = vpack.c.b16 %v583, %v579
  %v620 = vpack.c.b16 %v584, %v580
  %v621 = vpack.c.b16 %v585, %v581
  %v622 = vpack.c.b16 %v590, %v586
  %v623 = vpack.c.b16 %v591, %v587
  %v624 = vpack.c.b16 %v592, %v588
  %v625 = vpack.c.b16 %v593, %v589
  %658 = vmatprep.subr.bf16.mxu0 %v623
  %659 = vmatpush1.bf16.msra.mxu0 %v622
  %660 = vmatprep.subr.bf16.mxu0 %v619
  %661 = vmatpush1.bf16.msra.mxu0 %v618
  %662 = vmatprep.subr.bf16.mxu0 %v615
  %663 = vmatpush1.bf16.msra.mxu0 %v614
  %664 = vmatprep.subr.bf16.mxu0 %v611
  %665 = vmatpush1.bf16.msra.mxu0 %v610
  %666 = vmatprep.subr.bf16.mxu0 %v607
  %667 = vmatpush1.bf16.msra.mxu0 %v606
  %668 = vmatprep.subr.bf16.mxu0 %v603
  %669 = vmatpush1.bf16.msra.mxu0 %v602
  %670 = vmatprep.subr.bf16.mxu0 %v599
  %671 = vmatpush1.bf16.msra.mxu0 %v598
  %672 = vmatprep.subr.bf16.mxu0 %v595
  %673 = vmatpush1.bf16.msra.mxu0 %v594
  %674 = vmatprep.subr.bf16.mxu0 0
  %675 = vmatpush2.bf16.msra.mxu0 0
  %676 = vmatprep.subr.bf16.mxu0 0
  %677 = vmatpush2.bf16.msra.mxu0 0
  %678 = vmatprep.subr.bf16.mxu0 0
  %679 = vmatpush2.bf16.msra.mxu0 0
  %680 = vmatprep.subr.bf16.mxu0 0
  %681 = vmatpush2.bf16.msra.mxu0 0
  %682 = vmatprep.subr.bf16.mxu0 0
  %683 = vmatpush2.bf16.msra.mxu0 0
  %684 = vmatprep.subr.bf16.mxu0 0
  %685 = vmatpush2.bf16.msra.mxu0 0
  %686 = vmatprep.subr.bf16.mxu0 0
  %687 = vmatpush2.bf16.msra.mxu0 0
  %688 = vmatprep.subr.bf16.mxu0 0
  %689 = vmatpush2.bf16.msra.mxu0 0
  %690 = vmatprep.mubr.bf16.mxu0 0
  %691 = vmatmul.mubr.bf16.gmra.mxu0 %v493
  %v692 = vpop.f32.mrf.mxu0
  %v693 = vadd.f32 0.0, %v692
  %v694 = vpop.f32.mrf.mxu0
  %v695 = vadd.f32 0.0, %v694
  %v696 = vpop.f32.mrf.mxu0
  %v697 = vpop.f32.mrf.mxu0
  %698 = vdwg.mxu0
  %699 = vmatprep.subr.bf16.mxu0 %v625
  %700 = vmatpush1.bf16.msra.mxu0 %v624
  %701 = vmatprep.subr.bf16.mxu0 %v621
  %702 = vmatpush1.bf16.msra.mxu0 %v620
  %703 = vmatprep.subr.bf16.mxu0 %v617
  %704 = vmatpush1.bf16.msra.mxu0 %v616
  %705 = vmatprep.subr.bf16.mxu0 %v613
  %706 = vmatpush1.bf16.msra.mxu0 %v612
  %707 = vmatprep.subr.bf16.mxu0 %v609
  %708 = vmatpush1.bf16.msra.mxu0 %v608
  %709 = vmatprep.subr.bf16.mxu0 %v605
  %710 = vmatpush1.bf16.msra.mxu0 %v604
  %711 = vmatprep.subr.bf16.mxu0 %v601
  %712 = vmatpush1.bf16.msra.mxu0 %v600
  %713 = vmatprep.subr.bf16.mxu0 %v597
  %714 = vmatpush1.bf16.msra.mxu0 %v596
  %715 = vmatprep.subr.bf16.mxu0 0
  %716 = vmatpush2.bf16.msra.mxu0 0
  %717 = vmatprep.subr.bf16.mxu0 0
  %718 = vmatpush2.bf16.msra.mxu0 0
  %719 = vmatprep.subr.bf16.mxu0 0
  %720 = vmatpush2.bf16.msra.mxu0 0
  %721 = vmatprep.subr.bf16.mxu0 0
  %722 = vmatpush2.bf16.msra.mxu0 0
  %723 = vmatprep.subr.bf16.mxu0 0
  %724 = vmatpush2.bf16.msra.mxu0 0
  %725 = vmatprep.subr.bf16.mxu0 0
  %726 = vmatpush2.bf16.msra.mxu0 0
  %727 = vmatprep.subr.bf16.mxu0 0
  %728 = vmatpush2.bf16.msra.mxu0 0
  %729 = vmatprep.subr.bf16.mxu0 0
  %730 = vmatpush2.bf16.msra.mxu0 0
  %731 = vmatprep.mubr.bf16.mxu0 0
  %732 = vmatmul.mubr.bf16.gmra.mxu0 %v493
  %v733 = vpop.f32.mrf.mxu0
  %v734 = vadd.f32 0.0, %v733
  %v735 = vpop.f32.mrf.mxu0
  %v736 = vadd.f32 0.0, %v735
  %v737 = vpop.f32.mrf.mxu0
  %v738 = vpop.f32.mrf.mxu0
  %739 = vdwg.mxu0
  %v740 = vadd.f32 %v494, %v693
  %v741 = vadd.f32 %v495, %v695
  %v742 = vadd.f32 %v496, %v734
  %v743 = vadd.f32 %v497, %v736
  %v744 = vmul.f32 %v740, 0.5
  %v745 = vtanh.pop %v744
  %v746 = vadd.f32 %v745, 1.0
  %v747 = vmul.f32 %v746, 0.5
  %v748 = vmul.f32 %v741, 0.5
  %v749 = vtanh.pop %v748
  %v750 = vadd.f32 %v749, 1.0
  %v751 = vmul.f32 %v750, 0.5
  %v752 = vtanh.pop %v742
  %v753 = vmul.f32 %v743, 0.5
  %v754 = vtanh.pop %v753
  %v755 = vadd.f32 %v754, 1.0
  %v756 = vmul.f32 %v755, 0.5
  %v757 = vld [vmem:[#allocation4] sm:$0xff]
  %v758 = vmul.f32 %v751, %v757
  %v759 = vmul.f32 %v747, %v752
  %v760 = vadd.f32 %v758, %v759
  %761 = vst [vmem:[#allocation4] sm:$0xff] %v760
  %v762 = vtanh.pop %v760
  %v763 = vmul.f32 %v756, %v762
  %v764 = vpack.c.bf16 %v763, %v763
  %s765 = scalar_lea.vmem [#allocation3], 4
  %766 = vst [vmem:[%s765] sm:$0xf] %v764
  %v767 = vld [vmem:[%s765] sm:$0xf]
  %s768 = scalar_lea.vmem [#allocation2], 32
  %v769 = vld [vmem:[%s768] sm:$0xff]
  %v770 = vld [vmem:[%s768 + $0x8] sm:$0xff]
  %v771 = vld [vmem:[%s768 + $0x10] sm:$0xff]
  %v772 = vld [vmem:[%s768 + $0x18] sm:$0xff]
  %773 = vmatprep.subr.bf16.mxu0 %v623
  %774 = vmatpush1.bf16.msra.mxu0 %v622
  %775 = vmatprep.subr.bf16.mxu0 %v619
  %776 = vmatpush1.bf16.msra.mxu0 %v618
  %777 = vmatprep.subr.bf16.mxu0 %v615
  %778 = vmatpush1.bf16.msra.mxu0 %v614
  %779 = vmatprep.subr.bf16.mxu0 %v611
  %780 = vmatpush1.bf16.msra.mxu0 %v610
  %781 = vmatprep.subr.bf16.mxu0 %v607
  %782 = vmatpush1.bf16.msra.mxu0 %v606
  %783 = vmatprep.subr.bf16.mxu0 %v603
  %784 = vmatpush1.bf16.msra.mxu0 %v602
  %785 = vmatprep.subr.bf16.mxu0 %v599
  %786 = vmatpush1.bf16.msra.mxu0 %v598
  %787 = vmatprep.subr.bf16.mxu0 %v595
  %788 = vmatpush1.bf16.msra.mxu0 %v594
  %789 = vmatprep.subr.bf16.mxu0 0
  %790 = vmatpush2.bf16.msra.mxu0 0
  %791 = vmatprep.subr.bf16.mxu0 0
  %792 = vmatpush2.bf16.msra.mxu0 0
  %793 = vmatprep.subr.bf16.mxu0 0
  %794 = vmatpush2.bf16.msra.mxu0 0
  %795 = vmatprep.subr.bf16.mxu0 0
  %796 = vmatpush2.bf16.msra.mxu0 0
  %797 = vmatprep.subr.bf16.mxu0 0
  %798 = vmatpush2.bf16.msra.mxu0 0
  %799 = vmatprep.subr.bf16.mxu0 0
  %800 = vmatpush2.bf16.msra.mxu0 0
  %801 = vmatprep.subr.bf16.mxu0 0
  %802 = vmatpush2.bf16.msra.mxu0 0
  %803 = vmatprep.subr.bf16.mxu0 0
  %804 = vmatpush2.bf16.msra.mxu0 0
  %805 = vmatprep.mubr.bf16.mxu0 0
  %806 = vmatmul.mubr.bf16.gmra.mxu0 %v767
  %v807 = vpop.f32.mrf.mxu0
  %v808 = vadd.f32 0.0, %v807
  %v809 = vpop.f32.mrf.mxu0
  %v810 = vadd.f32 0.0, %v809
  %v811 = vpop.f32.mrf.mxu0
  %v812 = vpop.f32.mrf.mxu0
  %813 = vdwg.mxu0
  %814 = vmatprep.subr.bf16.mxu0 %v625
  %815 = vmatpush1.bf16.msra.mxu0 %v624
  %816 = vmatprep.subr.bf16.mxu0 %v621
  %817 = vmatpush1.bf16.msra.mxu0 %v620
  %818 = vmatprep.subr.bf16.mxu0 %v617
  %819 = vmatpush1.bf16.msra.mxu0 %v616
  %820 = vmatprep.subr.bf16.mxu0 %v613
  %821 = vmatpush1.bf16.msra.mxu0 %v612
  %822 = vmatprep.subr.bf16.mxu0 %v609
  %823 = vmatpush1.bf16.msra.mxu0 %v608
  %824 = vmatprep.subr.bf16.mxu0 %v605
  %825 = vmatpush1.bf16.msra.mxu0 %v604
  %826 = vmatprep.subr.bf16.mxu0 %v601
  %827 = vmatpush1.bf16.msra.mxu0 %v600
  %828 = vmatprep.subr.bf16.mxu0 %v597
  %829 = vmatpush1.bf16.msra.mxu0 %v596
  %830 = vmatprep.subr.bf16.mxu0 0
  %831 = vmatpush2.bf16.msra.mxu0 0
  %832 = vmatprep.subr.bf16.mxu0 0
  %833 = vmatpush2.bf16.msra.mxu0 0
  %834 = vmatprep.subr.bf16.mxu0 0
  %835 = vmatpush2.bf16.msra.mxu0 0
  %836 = vmatprep.subr.bf16.mxu0 0
  %837 = vmatpush2.bf16.msra.mxu0 0
  %838 = vmatprep.subr.bf16.mxu0 0
  %839 = vmatpush2.bf16.msra.mxu0 0
  %840 = vmatprep.subr.bf16.mxu0 0
  %841 = vmatpush2.bf16.msra.mxu0 0
  %842 = vmatprep.subr.bf16.mxu0 0
  %843 = vmatpush2.bf16.msra.mxu0 0
  %844 = vmatprep.subr.bf16.mxu0 0
  %845 = vmatpush2.bf16.msra.mxu0 0
  %846 = vmatprep.mubr.bf16.mxu0 0
  %847 = vmatmul.mubr.bf16.gmra.mxu0 %v767
  %v848 = vpop.f32.mrf.mxu0
  %v849 = vadd.f32 0.0, %v848
  %v850 = vpop.f32.mrf.mxu0
  %v851 = vadd.f32 0.0, %v850
  %v852 = vpop.f32.mrf.mxu0
  %v853 = vpop.f32.mrf.mxu0
  %854 = vdwg.mxu0
  %v855 = vadd.f32 %v769, %v808
  %v856 = vadd.f32 %v770, %v810
  %v857 = vadd.f32 %v771, %v849
  %v858 = vadd.f32 %v772, %v851
  %v859 = vmul.f32 %v855, 0.5
  %v860 = vtanh.pop %v859
  %v861 = vadd.f32 %v860, 1.0
  %v862 = vmul.f32 %v861, 0.5
  %v863 = vmul.f32 %v856, 0.5
  %v864 = vtanh.pop %v863
  %v865 = vadd.f32 %v864, 1.0
  %v866 = vmul.f32 %v865, 0.5
  %v867 = vtanh.pop %v857
  %v868 = vmul.f32 %v858, 0.5
  %v869 = vtanh.pop %v868
  %v870 = vadd.f32 %v869, 1.0
  %v871 = vmul.f32 %v870, 0.5
  %v872 = vld [vmem:[#allocation4] sm:$0xff]
  %v873 = vmul.f32 %v866, %v872
  %v874 = vmul.f32 %v862, %v867
  %v875 = vadd.f32 %v873, %v874
  %876 = vst [vmem:[#allocation4] sm:$0xff] %v875
  %v877 = vtanh.pop %v875
  %v878 = vmul.f32 %v871, %v877
  %v879 = vpack.c.bf16 %v878, %v878
  %s880 = scalar_lea.vmem [#allocation3], 8
  %881 = vst [vmem:[%s880] sm:$0xf] %v879
  %v882 = vld [vmem:[%s880] sm:$0xf]
  %s883 = scalar_lea.vmem [#allocation2], 64
  %v884 = vld [vmem:[%s883] sm:$0xff]
  %v885 = vld [vmem:[%s883 + $0x8] sm:$0xff]
  %v886 = vld [vmem:[%s883 + $0x10] sm:$0xff]
  %v887 = vld [vmem:[%s883 + $0x18] sm:$0xff]
  %888 = vmatprep.subr.bf16.mxu0 %v623
  %889 = vmatpush1.bf16.msra.mxu0 %v622
  %890 = vmatprep.subr.bf16.mxu0 %v619
  %891 = vmatpush1.bf16.msra.mxu0 %v618
  %892 = vmatprep.subr.bf16.mxu0 %v615
  %893 = vmatpush1.bf16.msra.mxu0 %v614
  %894 = vmatprep.subr.bf16.mxu0 %v611
  %895 = vmatpush1.bf16.msra.mxu0 %v610
  %896 = vmatprep.subr.bf16.mxu0 %v607
  %897 = vmatpush1.bf16.msra.mxu0 %v606
  %898 = vmatprep.subr.bf16.mxu0 %v603
  %899 = vmatpush1.bf16.msra.mxu0 %v602
  %900 = vmatprep.subr.bf16.mxu0 %v599
  %901 = vmatpush1.bf16.msra.mxu0 %v598
  %902 = vmatprep.subr.bf16.mxu0 %v595
  %903 = vmatpush1.bf16.msra.mxu0 %v594
  %904 = vmatprep.subr.bf16.mxu0 0
  %905 = vmatpush2.bf16.msra.mxu0 0
  %906 = vmatprep.subr.bf16.mxu0 0
  %907 = vmatpush2.bf16.msra.mxu0 0
  %908 = vmatprep.subr.bf16.mxu0 0
  %909 = vmatpush2.bf16.msra.mxu0 0
  %910 = vmatprep.subr.bf16.mxu0 0
  %911 = vmatpush2.bf16.msra.mxu0 0
  %912 = vmatprep.subr.bf16.mxu0 0
  %913 = vmatpush2.bf16.msra.mxu0 0
  %914 = vmatprep.subr.bf16.mxu0 0
  %915 = vmatpush2.bf16.msra.mxu0 0
  %916 = vmatprep.subr.bf16.mxu0 0
  %917 = vmatpush2.bf16.msra.mxu0 0
  %918 = vmatprep.subr.bf16.mxu0 0
  %919 = vmatpush2.bf16.msra.mxu0 0
  %920 = vmatprep.mubr.bf16.mxu0 0
  %921 = vmatmul.mubr.bf16.gmra.mxu0 %v882
  %v922 = vpop.f32.mrf.mxu0
  %v923 = vadd.f32 0.0, %v922
  %v924 = vpop.f32.mrf.mxu0
  %v925 = vadd.f32 0.0, %v924
  %v926 = vpop.f32.mrf.mxu0
  %v927 = vpop.f32.mrf.mxu0
  %928 = vdwg.mxu0
  %929 = vmatprep.subr.bf16.mxu0 %v625
  %930 = vmatpush1.bf16.msra.mxu0 %v624
  %931 = vmatprep.subr.bf16.mxu0 %v621
  %932 = vmatpush1.bf16.msra.mxu0 %v620
  %933 = vmatprep.subr.bf16.mxu0 %v617
  %934 = vmatpush1.bf16.msra.mxu0 %v616
  %935 = vmatprep.subr.bf16.mxu0 %v613
  %936 = vmatpush1.bf16.msra.mxu0 %v612
  %937 = vmatprep.subr.bf16.mxu0 %v609
  %938 = vmatpush1.bf16.msra.mxu0 %v608
  %939 = vmatprep.subr.bf16.mxu0 %v605
  %940 = vmatpush1.bf16.msra.mxu0 %v604
  %941 = vmatprep.subr.bf16.mxu0 %v601
  %942 = vmatpush1.bf16.msra.mxu0 %v600
  %943 = vmatprep.subr.bf16.mxu0 %v597
  %944 = vmatpush1.bf16.msra.mxu0 %v596
  %945 = vmatprep.subr.bf16.mxu0 0
  %946 = vmatpush2.bf16.msra.mxu0 0
  %947 = vmatprep.subr.bf16.mxu0 0
  %948 = vmatpush2.bf16.msra.mxu0 0
  %949 = vmatprep.subr.bf16.mxu0 0
  %950 = vmatpush2.bf16.msra.mxu0 0
  %951 = vmatprep.subr.bf16.mxu0 0
  %952 = vmatpush2.bf16.msra.mxu0 0
  %953 = vmatprep.subr.bf16.mxu0 0
  %954 = vmatpush2.bf16.msra.mxu0 0
  %955 = vmatprep.subr.bf16.mxu0 0
  %956 = vmatpush2.bf16.msra.mxu0 0
  %957 = vmatprep.subr.bf16.mxu0 0
  %958 = vmatpush2.bf16.msra.mxu0 0
  %959 = vmatprep.subr.bf16.mxu0 0
  %960 = vmatpush2.bf16.msra.mxu0 0
  %961 = vmatprep.mubr.bf16.mxu0 0
  %962 = vmatmul.mubr.bf16.gmra.mxu0 %v882
  %v963 = vpop.f32.mrf.mxu0
  %v964 = vadd.f32 0.0, %v963
  %v965 = vpop.f32.mrf.mxu0
  %v966 = vadd.f32 0.0, %v965
  %v967 = vpop.f32.mrf.mxu0
  %v968 = vpop.f32.mrf.mxu0
  %969 = vdwg.mxu0
  %v970 = vadd.f32 %v884, %v923
  %v971 = vadd.f32 %v885, %v925
  %v972 = vadd.f32 %v886, %v964
  %v973 = vadd.f32 %v887, %v966
  %v974 = vmul.f32 %v970, 0.5
  %v975 = vtanh.pop %v974
  %v976 = vadd.f32 %v975, 1.0
  %v977 = vmul.f32 %v976, 0.5
  %v978 = vmul.f32 %v971, 0.5
  %v979 = vtanh.pop %v978
  %v980 = vadd.f32 %v979, 1.0
  %v981 = vmul.f32 %v980, 0.5
  %v982 = vtanh.pop %v972
  %v983 = vmul.f32 %v973, 0.5
  %v984 = vtanh.pop %v983
  %v985 = vadd.f32 %v984, 1.0
  %v986 = vmul.f32 %v985, 0.5
  %v987 = vld [vmem:[#allocation4] sm:$0xff]
  %v988 = vmul.f32 %v981, %v987
  %v989 = vmul.f32 %v977, %v982
  %v990 = vadd.f32 %v988, %v989
  %991 = vst [vmem:[#allocation4] sm:$0xff] %v990
  %v992 = vtanh.pop %v990
  %v993 = vmul.f32 %v986, %v992
  %v994 = vpack.c.bf16 %v993, %v993
  %s995 = scalar_lea.vmem [#allocation3], 12
  %996 = vst [vmem:[%s995] sm:$0xf] %v994
  %v997 = vld [vmem:[%s995] sm:$0xf]
  %s998 = scalar_lea.vmem [#allocation2], 96
  %v999 = vld [vmem:[%s998] sm:$0xff]
  %v1000 = vld [vmem:[%s998 + $0x8] sm:$0xff]
  %v1001 = vld [vmem:[%s998 + $0x10] sm:$0xff]
  %v1002 = vld [vmem:[%s998 + $0x18] sm:$0xff]
  %1003 = vmatprep.subr.bf16.mxu0 %v623
  %1004 = vmatpush1.bf16.msra.mxu0 %v622
  %1005 = vmatprep.subr.bf16.mxu0 %v619
  %1006 = vmatpush1.bf16.msra.mxu0 %v618
  %1007 = vmatprep.subr.bf16.mxu0 %v615
  %1008 = vmatpush1.bf16.msra.mxu0 %v614
  %1009 = vmatprep.subr.bf16.mxu0 %v611
  %1010 = vmatpush1.bf16.msra.mxu0 %v610
  %1011 = vmatprep.subr.bf16.mxu0 %v607
  %1012 = vmatpush1.bf16.msra.mxu0 %v606
  %1013 = vmatprep.subr.bf16.mxu0 %v603
  %1014 = vmatpush1.bf16.msra.mxu0 %v602
  %1015 = vmatprep.subr.bf16.mxu0 %v599
  %1016 = vmatpush1.bf16.msra.mxu0 %v598
  %1017 = vmatprep.subr.bf16.mxu0 %v595
  %1018 = vmatpush1.bf16.msra.mxu0 %v594
  %1019 = vmatprep.subr.bf16.mxu0 0
  %1020 = vmatpush2.bf16.msra.mxu0 0
  %1021 = vmatprep.subr.bf16.mxu0 0
  %1022 = vmatpush2.bf16.msra.mxu0 0
  %1023 = vmatprep.subr.bf16.mxu0 0
  %1024 = vmatpush2.bf16.msra.mxu0 0
  %1025 = vmatprep.subr.bf16.mxu0 0
  %1026 = vmatpush2.bf16.msra.mxu0 0
  %1027 = vmatprep.subr.bf16.mxu0 0
  %1028 = vmatpush2.bf16.msra.mxu0 0
  %1029 = vmatprep.subr.bf16.mxu0 0
  %1030 = vmatpush2.bf16.msra.mxu0 0
  %1031 = vmatprep.subr.bf16.mxu0 0
  %1032 = vmatpush2.bf16.msra.mxu0 0
  %1033 = vmatprep.subr.bf16.mxu0 0
  %1034 = vmatpush2.bf16.msra.mxu0 0
  %1035 = vmatprep.mubr.bf16.mxu0 0
  %1036 = vmatmul.mubr.bf16.gmra.mxu0 %v997
  %v1037 = vpop.f32.mrf.mxu0
  %v1038 = vadd.f32 0.0, %v1037
  %v1039 = vpop.f32.mrf.mxu0
  %v1040 = vadd.f32 0.0, %v1039
  %v1041 = vpop.f32.mrf.mxu0
  %v1042 = vpop.f32.mrf.mxu0
  %1043 = vdwg.mxu0
  %1044 = vmatprep.subr.bf16.mxu0 %v625
  %1045 = vmatpush1.bf16.msra.mxu0 %v624
  %1046 = vmatprep.subr.bf16.mxu0 %v621
  %1047 = vmatpush1.bf16.msra.mxu0 %v620
  %1048 = vmatprep.subr.bf16.mxu0 %v617
  %1049 = vmatpush1.bf16.msra.mxu0 %v616
  %1050 = vmatprep.subr.bf16.mxu0 %v613
  %1051 = vmatpush1.bf16.msra.mxu0 %v612
  %1052 = vmatprep.subr.bf16.mxu0 %v609
  %1053 = vmatpush1.bf16.msra.mxu0 %v608
  %1054 = vmatprep.subr.bf16.mxu0 %v605
  %1055 = vmatpush1.bf16.msra.mxu0 %v604
  %1056 = vmatprep.subr.bf16.mxu0 %v601
  %1057 = vmatpush1.bf16.msra.mxu0 %v600
  %1058 = vmatprep.subr.bf16.mxu0 %v597
  %1059 = vmatpush1.bf16.msra.mxu0 %v596
  %1060 = vmatprep.subr.bf16.mxu0 0
  %1061 = vmatpush2.bf16.msra.mxu0 0
  %1062 = vmatprep.subr.bf16.mxu0 0
  %1063 = vmatpush2.bf16.msra.mxu0 0
  %1064 = vmatprep.subr.bf16.mxu0 0
  %1065 = vmatpush2.bf16.msra.mxu0 0
  %1066 = vmatprep.subr.bf16.mxu0 0
  %1067 = vmatpush2.bf16.msra.mxu0 0
  %1068 = vmatprep.subr.bf16.mxu0 0
  %1069 = vmatpush2.bf16.msra.mxu0 0
  %1070 = vmatprep.subr.bf16.mxu0 0
  %1071 = vmatpush2.bf16.msra.mxu0 0
  %1072 = vmatprep.subr.bf16.mxu0 0
  %1073 = vmatpush2.bf16.msra.mxu0 0
  %1074 = vmatprep.subr.bf16.mxu0 0
  %1075 = vmatpush2.bf16.msra.mxu0 0
  %1076 = vmatprep.mubr.bf16.mxu0 0
  %1077 = vmatmul.mubr.bf16.gmra.mxu0 %v997
  %v1078 = vpop.f32.mrf.mxu0
  %v1079 = vadd.f32 0.0, %v1078
  %v1080 = vpop.f32.mrf.mxu0
  %v1081 = vadd.f32 0.0, %v1080
  %v1082 = vpop.f32.mrf.mxu0
  %v1083 = vpop.f32.mrf.mxu0
  %1084 = vdwg.mxu0
  %v1085 = vadd.f32 %v999, %v1038
  %v1086 = vadd.f32 %v1000, %v1040
  %v1087 = vadd.f32 %v1001, %v1079
  %v1088 = vadd.f32 %v1002, %v1081
  %v1089 = vmul.f32 %v1085, 0.5
  %v1090 = vtanh.pop %v1089
  %v1091 = vadd.f32 %v1090, 1.0
  %v1092 = vmul.f32 %v1091, 0.5
  %v1093 = vmul.f32 %v1086, 0.5
  %v1094 = vtanh.pop %v1093
  %v1095 = vadd.f32 %v1094, 1.0
  %v1096 = vmul.f32 %v1095, 0.5
  %v1097 = vtanh.pop %v1087
  %v1098 = vmul.f32 %v1088, 0.5
  %v1099 = vtanh.pop %v1098
  %v1100 = vadd.f32 %v1099, 1.0
  %v1101 = vmul.f32 %v1100, 0.5
  %v1102 = vld [vmem:[#allocation4] sm:$0xff]
  %v1103 = vmul.f32 %v1096, %v1102
  %v1104 = vmul.f32 %v1092, %v1097
  %v1105 = vadd.f32 %v1103, %v1104
  %1106 = vst [vmem:[#allocation4] sm:$0xff] %v1105
  %v1107 = vtanh.pop %v1105
  %v1108 = vmul.f32 %v1101, %v1107
  %v1109 = vpack.c.bf16 %v1108, %v1108
  %s1110 = scalar_lea.vmem [#allocation3], 16
  %1111 = vst [vmem:[%s1110] sm:$0xf] %v1109
  %v1112 = vld [vmem:[%s1110] sm:$0xf]
  %s1113 = scalar_lea.vmem [#allocation2], 128
  %v1114 = vld [vmem:[%s1113] sm:$0xff]
  %v1115 = vld [vmem:[%s1113 + $0x8] sm:$0xff]
  %v1116 = vld [vmem:[%s1113 + $0x10] sm:$0xff]
  %v1117 = vld [vmem:[%s1113 + $0x18] sm:$0xff]
  %1118 = vmatprep.subr.bf16.mxu0 %v623
  %1119 = vmatpush1.bf16.msra.mxu0 %v622
  %1120 = vmatprep.subr.bf16.mxu0 %v619
  %1121 = vmatpush1.bf16.msra.mxu0 %v618
  %1122 = vmatprep.subr.bf16.mxu0 %v615
  %1123 = vmatpush1.bf16.msra.mxu0 %v614
  %1124 = vmatprep.subr.bf16.mxu0 %v611
  %1125 = vmatpush1.bf16.msra.mxu0 %v610
  %1126 = vmatprep.subr.bf16.mxu0 %v607
  %1127 = vmatpush1.bf16.msra.mxu0 %v606
  %1128 = vmatprep.subr.bf16.mxu0 %v603
  %1129 = vmatpush1.bf16.msra.mxu0 %v602
  %1130 = vmatprep.subr.bf16.mxu0 %v599
  %1131 = vmatpush1.bf16.msra.mxu0 %v598
  %1132 = vmatprep.subr.bf16.mxu0 %v595
  %1133 = vmatpush1.bf16.msra.mxu0 %v594
  %1134 = vmatprep.subr.bf16.mxu0 0
  %1135 = vmatpush2.bf16.msra.mxu0 0
  %1136 = vmatprep.subr.bf16.mxu0 0
  %1137 = vmatpush2.bf16.msra.mxu0 0
  %1138 = vmatprep.subr.bf16.mxu0 0
  %1139 = vmatpush2.bf16.msra.mxu0 0
  %1140 = vmatprep.subr.bf16.mxu0 0
  %1141 = vmatpush2.bf16.msra.mxu0 0
  %1142 = vmatprep.subr.bf16.mxu0 0
  %1143 = vmatpush2.bf16.msra.mxu0 0
  %1144 = vmatprep.subr.bf16.mxu0 0
  %1145 = vmatpush2.bf16.msra.mxu0 0
  %1146 = vmatprep.subr.bf16.mxu0 0
  %1147 = vmatpush2.bf16.msra.mxu0 0
  %1148 = vmatprep.subr.bf16.mxu0 0
  %1149 = vmatpush2.bf16.msra.mxu0 0
  %1150 = vmatprep.mubr.bf16.mxu0 0
  %1151 = vmatmul.mubr.bf16.gmra.mxu0 %v1112
  %v1152 = vpop.f32.mrf.mxu0
  %v1153 = vadd.f32 0.0, %v1152
  %v1154 = vpop.f32.mrf.mxu0
  %v1155 = vadd.f32 0.0, %v1154
  %v1156 = vpop.f32.mrf.mxu0
  %v1157 = vpop.f32.mrf.mxu0
  %1158 = vdwg.mxu0
  %1159 = vmatprep.subr.bf16.mxu0 %v625
  %1160 = vmatpush1.bf16.msra.mxu0 %v624
  %1161 = vmatprep.subr.bf16.mxu0 %v621
  %1162 = vmatpush1.bf16.msra.mxu0 %v620
  %1163 = vmatprep.subr.bf16.mxu0 %v617
  %1164 = vmatpush1.bf16.msra.mxu0 %v616
  %1165 = vmatprep.subr.bf16.mxu0 %v613
  %1166 = vmatpush1.bf16.msra.mxu0 %v612
  %1167 = vmatprep.subr.bf16.mxu0 %v609
  %1168 = vmatpush1.bf16.msra.mxu0 %v608
  %1169 = vmatprep.subr.bf16.mxu0 %v605
  %1170 = vmatpush1.bf16.msra.mxu0 %v604
  %1171 = vmatprep.subr.bf16.mxu0 %v601
  %1172 = vmatpush1.bf16.msra.mxu0 %v600
  %1173 = vmatprep.subr.bf16.mxu0 %v597
  %1174 = vmatpush1.bf16.msra.mxu0 %v596
  %1175 = vmatprep.subr.bf16.mxu0 0
  %1176 = vmatpush2.bf16.msra.mxu0 0
  %1177 = vmatprep.subr.bf16.mxu0 0
  %1178 = vmatpush2.bf16.msra.mxu0 0
  %1179 = vmatprep.subr.bf16.mxu0 0
  %1180 = vmatpush2.bf16.msra.mxu0 0
  %1181 = vmatprep.subr.bf16.mxu0 0
  %1182 = vmatpush2.bf16.msra.mxu0 0
  %1183 = vmatprep.subr.bf16.mxu0 0
  %1184 = vmatpush2.bf16.msra.mxu0 0
  %1185 = vmatprep.subr.bf16.mxu0 0
  %1186 = vmatpush2.bf16.msra.mxu0 0
  %1187 = vmatprep.subr.bf16.mxu0 0
  %1188 = vmatpush2.bf16.msra.mxu0 0
  %1189 = vmatprep.subr.bf16.mxu0 0
  %1190 = vmatpush2.bf16.msra.mxu0 0
  %1191 = vmatprep.mubr.bf16.mxu0 0
  %1192 = vmatmul.mubr.bf16.gmra.mxu0 %v1112
  %v1193 = vpop.f32.mrf.mxu0
  %v1194 = vadd.f32 0.0, %v1193
  %v1195 = vpop.f32.mrf.mxu0
  %v1196 = vadd.f32 0.0, %v1195
  %v1197 = vpop.f32.mrf.mxu0
  %v1198 = vpop.f32.mrf.mxu0
  %1199 = vdwg.mxu0
  %v1200 = vadd.f32 %v1114, %v1153
  %v1201 = vadd.f32 %v1115, %v1155
  %v1202 = vadd.f32 %v1116, %v1194
  %v1203 = vadd.f32 %v1117, %v1196
  %v1204 = vmul.f32 %v1200, 0.5
  %v1205 = vtanh.pop %v1204
  %v1206 = vadd.f32 %v1205, 1.0
  %v1207 = vmul.f32 %v1206, 0.5
  %v1208 = vmul.f32 %v1201, 0.5
  %v1209 = vtanh.pop %v1208
  %v1210 = vadd.f32 %v1209, 1.0
  %v1211 = vmul.f32 %v1210, 0.5
  %v1212 = vtanh.pop %v1202
  %v1213 = vmul.f32 %v1203, 0.5
  %v1214 = vtanh.pop %v1213
  %v1215 = vadd.f32 %v1214, 1.0
  %v1216 = vmul.f32 %v1215, 0.5
  %v1217 = vld [vmem:[#allocation4] sm:$0xff]
  %v1218 = vmul.f32 %v1211, %v1217
  %v1219 = vmul.f32 %v1207, %v1212
  %v1220 = vadd.f32 %v1218, %v1219
  %1221 = vst [vmem:[#allocation4] sm:$0xff] %v1220
  %v1222 = vtanh.pop %v1220
  %v1223 = vmul.f32 %v1216, %v1222
  %v1224 = vpack.c.bf16 %v1223, %v1223
  %s1225 = scalar_lea.vmem [#allocation3], 20
  %1226 = vst [vmem:[%s1225] sm:$0xf] %v1224
  %v1227 = vld [vmem:[%s1225] sm:$0xf]
  %s1228 = scalar_lea.vmem [#allocation2], 160
  %v1229 = vld [vmem:[%s1228] sm:$0xff]
  %v1230 = vld [vmem:[%s1228 + $0x8] sm:$0xff]
  %v1231 = vld [vmem:[%s1228 + $0x10] sm:$0xff]
  %v1232 = vld [vmem:[%s1228 + $0x18] sm:$0xff]
  %1233 = vmatprep.subr.bf16.mxu0 %v623
  %1234 = vmatpush1.bf16.msra.mxu0 %v622
  %1235 = vmatprep.subr.bf16.mxu0 %v619
  %1236 = vmatpush1.bf16.msra.mxu0 %v618
  %1237 = vmatprep.subr.bf16.mxu0 %v615
  %1238 = vmatpush1.bf16.msra.mxu0 %v614
  %1239 = vmatprep.subr.bf16.mxu0 %v611
  %1240 = vmatpush1.bf16.msra.mxu0 %v610
  %1241 = vmatprep.subr.bf16.mxu0 %v607
  %1242 = vmatpush1.bf16.msra.mxu0 %v606
  %1243 = vmatprep.subr.bf16.mxu0 %v603
  %1244 = vmatpush1.bf16.msra.mxu0 %v602
  %1245 = vmatprep.subr.bf16.mxu0 %v599
  %1246 = vmatpush1.bf16.msra.mxu0 %v598
  %1247 = vmatprep.subr.bf16.mxu0 %v595
  %1248 = vmatpush1.bf16.msra.mxu0 %v594
  %1249 = vmatprep.subr.bf16.mxu0 0
  %1250 = vmatpush2.bf16.msra.mxu0 0
  %1251 = vmatprep.subr.bf16.mxu0 0
  %1252 = vmatpush2.bf16.msra.mxu0 0
  %1253 = vmatprep.subr.bf16.mxu0 0
  %1254 = vmatpush2.bf16.msra.mxu0 0
  %1255 = vmatprep.subr.bf16.mxu0 0
  %1256 = vmatpush2.bf16.msra.mxu0 0
  %1257 = vmatprep.subr.bf16.mxu0 0
  %1258 = vmatpush2.bf16.msra.mxu0 0
  %1259 = vmatprep.subr.bf16.mxu0 0
  %1260 = vmatpush2.bf16.msra.mxu0 0
  %1261 = vmatprep.subr.bf16.mxu0 0
  %1262 = vmatpush2.bf16.msra.mxu0 0
  %1263 = vmatprep.subr.bf16.mxu0 0
  %1264 = vmatpush2.bf16.msra.mxu0 0
  %1265 = vmatprep.mubr.bf16.mxu0 0
  %1266 = vmatmul.mubr.bf16.gmra.mxu0 %v1227
  %v1267 = vpop.f32.mrf.mxu0
  %v1268 = vadd.f32 0.0, %v1267
  %v1269 = vpop.f32.mrf.mxu0
  %v1270 = vadd.f32 0.0, %v1269
  %v1271 = vpop.f32.mrf.mxu0
  %v1272 = vpop.f32.mrf.mxu0
  %1273 = vdwg.mxu0
  %1274 = vmatprep.subr.bf16.mxu0 %v625
  %1275 = vmatpush1.bf16.msra.mxu0 %v624
  %1276 = vmatprep.subr.bf16.mxu0 %v621
  %1277 = vmatpush1.bf16.msra.mxu0 %v620
  %1278 = vmatprep.subr.bf16.mxu0 %v617
  %1279 = vmatpush1.bf16.msra.mxu0 %v616
  %1280 = vmatprep.subr.bf16.mxu0 %v613
  %1281 = vmatpush1.bf16.msra.mxu0 %v612
  %1282 = vmatprep.subr.bf16.mxu0 %v609
  %1283 = vmatpush1.bf16.msra.mxu0 %v608
  %1284 = vmatprep.subr.bf16.mxu0 %v605
  %1285 = vmatpush1.bf16.msra.mxu0 %v604
  %1286 = vmatprep.subr.bf16.mxu0 %v601
  %1287 = vmatpush1.bf16.msra.mxu0 %v600
  %1288 = vmatprep.subr.bf16.mxu0 %v597
  %1289 = vmatpush1.bf16.msra.mxu0 %v596
  %1290 = vmatprep.subr.bf16.mxu0 0
  %1291 = vmatpush2.bf16.msra.mxu0 0
  %1292 = vmatprep.subr.bf16.mxu0 0
  %1293 = vmatpush2.bf16.msra.mxu0 0
  %1294 = vmatprep.subr.bf16.mxu0 0
  %1295 = vmatpush2.bf16.msra.mxu0 0
  %1296 = vmatprep.subr.bf16.mxu0 0
  %1297 = vmatpush2.bf16.msra.mxu0 0
  %1298 = vmatprep.subr.bf16.mxu0 0
  %1299 = vmatpush2.bf16.msra.mxu0 0
  %1300 = vmatprep.subr.bf16.mxu0 0
  %1301 = vmatpush2.bf16.msra.mxu0 0
  %1302 = vmatprep.subr.bf16.mxu0 0
  %1303 = vmatpush2.bf16.msra.mxu0 0
  %1304 = vmatprep.subr.bf16.mxu0 0
  %1305 = vmatpush2.bf16.msra.mxu0 0
  %1306 = vmatprep.mubr.bf16.mxu0 0
  %1307 = vmatmul.mubr.bf16.gmra.mxu0 %v1227
  %v1308 = vpop.f32.mrf.mxu0
  %v1309 = vadd.f32 0.0, %v1308
  %v1310 = vpop.f32.mrf.mxu0
  %v1311 = vadd.f32 0.0, %v1310
  %v1312 = vpop.f32.mrf.mxu0
  %v1313 = vpop.f32.mrf.mxu0
  %1314 = vdwg.mxu0
  %v1315 = vadd.f32 %v1229, %v1268
  %v1316 = vadd.f32 %v1230, %v1270
  %v1317 = vadd.f32 %v1231, %v1309
  %v1318 = vadd.f32 %v1232, %v1311
  %v1319 = vmul.f32 %v1315, 0.5
  %v1320 = vtanh.pop %v1319
  %v1321 = vadd.f32 %v1320, 1.0
  %v1322 = vmul.f32 %v1321, 0.5
  %v1323 = vmul.f32 %v1316, 0.5
  %v1324 = vtanh.pop %v1323
  %v1325 = vadd.f32 %v1324, 1.0
  %v1326 = vmul.f32 %v1325, 0.5
  %v1327 = vtanh.pop %v1317
  %v1328 = vmul.f32 %v1318, 0.5
  %v1329 = vtanh.pop %v1328
  %v1330 = vadd.f32 %v1329, 1.0
  %v1331 = vmul.f32 %v1330, 0.5
  %v1332 = vld [vmem:[#allocation4] sm:$0xff]
  %v1333 = vmul.f32 %v1326, %v1332
  %v1334 = vmul.f32 %v1322, %v1327
  %v1335 = vadd.f32 %v1333, %v1334
  %1336 = vst [vmem:[#allocation4] sm:$0xff] %v1335
  %v1337 = vtanh.pop %v1335
  %v1338 = vmul.f32 %v1331, %v1337
  %v1339 = vpack.c.bf16 %v1338, %v1338
  %s1340 = scalar_lea.vmem [#allocation3], 24
  %1341 = vst [vmem:[%s1340] sm:$0xf] %v1339
  %v1342 = vld [vmem:[%s1340] sm:$0xf]
  %s1343 = scalar_lea.vmem [#allocation2], 192
  %v1344 = vld [vmem:[%s1343] sm:$0xff]
  %v1345 = vld [vmem:[%s1343 + $0x8] sm:$0xff]
  %v1346 = vld [vmem:[%s1343 + $0x10] sm:$0xff]
  %v1347 = vld [vmem:[%s1343 + $0x18] sm:$0xff]
  %1348 = vmatprep.subr.bf16.mxu0 %v623
  %1349 = vmatpush1.bf16.msra.mxu0 %v622
  %1350 = vmatprep.subr.bf16.mxu0 %v619
  %1351 = vmatpush1.bf16.msra.mxu0 %v618
  %1352 = vmatprep.subr.bf16.mxu0 %v615
  %1353 = vmatpush1.bf16.msra.mxu0 %v614
  %1354 = vmatprep.subr.bf16.mxu0 %v611
  %1355 = vmatpush1.bf16.msra.mxu0 %v610
  %1356 = vmatprep.subr.bf16.mxu0 %v607
  %1357 = vmatpush1.bf16.msra.mxu0 %v606
  %1358 = vmatprep.subr.bf16.mxu0 %v603
  %1359 = vmatpush1.bf16.msra.mxu0 %v602
  %1360 = vmatprep.subr.bf16.mxu0 %v599
  %1361 = vmatpush1.bf16.msra.mxu0 %v598
  %1362 = vmatprep.subr.bf16.mxu0 %v595
  %1363 = vmatpush1.bf16.msra.mxu0 %v594
  %1364 = vmatprep.subr.bf16.mxu0 0
  %1365 = vmatpush2.bf16.msra.mxu0 0
  %1366 = vmatprep.subr.bf16.mxu0 0
  %1367 = vmatpush2.bf16.msra.mxu0 0
  %1368 = vmatprep.subr.bf16.mxu0 0
  %1369 = vmatpush2.bf16.msra.mxu0 0
  %1370 = vmatprep.subr.bf16.mxu0 0
  %1371 = vmatpush2.bf16.msra.mxu0 0
  %1372 = vmatprep.subr.bf16.mxu0 0
  %1373 = vmatpush2.bf16.msra.mxu0 0
  %1374 = vmatprep.subr.bf16.mxu0 0
  %1375 = vmatpush2.bf16.msra.mxu0 0
  %1376 = vmatprep.subr.bf16.mxu0 0
  %1377 = vmatpush2.bf16.msra.mxu0 0
  %1378 = vmatprep.subr.bf16.mxu0 0
  %1379 = vmatpush2.bf16.msra.mxu0 0
  %1380 = vmatprep.mubr.bf16.mxu0 0
  %1381 = vmatmul.mubr.bf16.gmra.mxu0 %v1342
  %v1382 = vpop.f32.mrf.mxu0
  %v1383 = vadd.f32 0.0, %v1382
  %v1384 = vpop.f32.mrf.mxu0
  %v1385 = vadd.f32 0.0, %v1384
  %v1386 = vpop.f32.mrf.mxu0
  %v1387 = vpop.f32.mrf.mxu0
  %1388 = vdwg.mxu0
  %1389 = vmatprep.subr.bf16.mxu0 %v625
  %1390 = vmatpush1.bf16.msra.mxu0 %v624
  %1391 = vmatprep.subr.bf16.mxu0 %v621
  %1392 = vmatpush1.bf16.msra.mxu0 %v620
  %1393 = vmatprep.subr.bf16.mxu0 %v617
  %1394 = vmatpush1.bf16.msra.mxu0 %v616
  %1395 = vmatprep.subr.bf16.mxu0 %v613
  %1396 = vmatpush1.bf16.msra.mxu0 %v612
  %1397 = vmatprep.subr.bf16.mxu0 %v609
  %1398 = vmatpush1.bf16.msra.mxu0 %v608
  %1399 = vmatprep.subr.bf16.mxu0 %v605
  %1400 = vmatpush1.bf16.msra.mxu0 %v604
  %1401 = vmatprep.subr.bf16.mxu0 %v601
  %1402 = vmatpush1.bf16.msra.mxu0 %v600
  %1403 = vmatprep.subr.bf16.mxu0 %v597
  %1404 = vmatpush1.bf16.msra.mxu0 %v596
  %1405 = vmatprep.subr.bf16.mxu0 0
  %1406 = vmatpush2.bf16.msra.mxu0 0
  %1407 = vmatprep.subr.bf16.mxu0 0
  %1408 = vmatpush2.bf16.msra.mxu0 0
  %1409 = vmatprep.subr.bf16.mxu0 0
  %1410 = vmatpush2.bf16.msra.mxu0 0
  %1411 = vmatprep.subr.bf16.mxu0 0
  %1412 = vmatpush2.bf16.msra.mxu0 0
  %1413 = vmatprep.subr.bf16.mxu0 0
  %1414 = vmatpush2.bf16.msra.mxu0 0
  %1415 = vmatprep.subr.bf16.mxu0 0
  %1416 = vmatpush2.bf16.msra.mxu0 0
  %1417 = vmatprep.subr.bf16.mxu0 0
  %1418 = vmatpush2.bf16.msra.mxu0 0
  %1419 = vmatprep.subr.bf16.mxu0 0
  %1420 = vmatpush2.bf16.msra.mxu0 0
  %1421 = vmatprep.mubr.bf16.mxu0 0
  %1422 = vmatmul.mubr.bf16.gmra.mxu0 %v1342
  %v1423 = vpop.f32.mrf.mxu0
  %v1424 = vadd.f32 0.0, %v1423
  %v1425 = vpop.f32.mrf.mxu0
  %v1426 = vadd.f32 0.0, %v1425
  %v1427 = vpop.f32.mrf.mxu0
  %v1428 = vpop.f32.mrf.mxu0
  %1429 = vdwg.mxu0
  %v1430 = vadd.f32 %v1344, %v1383
  %v1431 = vadd.f32 %v1345, %v1385
  %v1432 = vadd.f32 %v1346, %v1424
  %v1433 = vadd.f32 %v1347, %v1426
  %v1434 = vmul.f32 %v1430, 0.5
  %v1435 = vtanh.pop %v1434
  %v1436 = vadd.f32 %v1435, 1.0
  %v1437 = vmul.f32 %v1436, 0.5
  %v1438 = vmul.f32 %v1431, 0.5
  %v1439 = vtanh.pop %v1438
  %v1440 = vadd.f32 %v1439, 1.0
  %v1441 = vmul.f32 %v1440, 0.5
  %v1442 = vtanh.pop %v1432
  %v1443 = vmul.f32 %v1433, 0.5
  %v1444 = vtanh.pop %v1443
  %v1445 = vadd.f32 %v1444, 1.0
  %v1446 = vmul.f32 %v1445, 0.5
  %v1447 = vld [vmem:[#allocation4] sm:$0xff]
  %v1448 = vmul.f32 %v1441, %v1447
  %v1449 = vmul.f32 %v1437, %v1442
  %v1450 = vadd.f32 %v1448, %v1449
  %1451 = vst [vmem:[#allocation4] sm:$0xff] %v1450
  %v1452 = vtanh.pop %v1450
  %v1453 = vmul.f32 %v1446, %v1452
  %v1454 = vpack.c.bf16 %v1453, %v1453
  %s1455 = scalar_lea.vmem [#allocation3], 28
  %1456 = vst [vmem:[%s1455] sm:$0xf] %v1454
  %v1457 = vld [vmem:[%s1455] sm:$0xf]
  %s1458 = scalar_lea.vmem [#allocation2], 224
  %v1459 = vld [vmem:[%s1458] sm:$0xff]
  %v1460 = vld [vmem:[%s1458 + $0x8] sm:$0xff]
  %v1461 = vld [vmem:[%s1458 + $0x10] sm:$0xff]
  %v1462 = vld [vmem:[%s1458 + $0x18] sm:$0xff]
  %1463 = vmatprep.subr.bf16.mxu0 %v623
  %1464 = vmatpush1.bf16.msra.mxu0 %v622
  %1465 = vmatprep.subr.bf16.mxu0 %v619
  %1466 = vmatpush1.bf16.msra.mxu0 %v618
  %1467 = vmatprep.subr.bf16.mxu0 %v615
  %1468 = vmatpush1.bf16.msra.mxu0 %v614
  %1469 = vmatprep.subr.bf16.mxu0 %v611
  %1470 = vmatpush1.bf16.msra.mxu0 %v610
  %1471 = vmatprep.subr.bf16.mxu0 %v607
  %1472 = vmatpush1.bf16.msra.mxu0 %v606
  %1473 = vmatprep.subr.bf16.mxu0 %v603
  %1474 = vmatpush1.bf16.msra.mxu0 %v602
  %1475 = vmatprep.subr.bf16.mxu0 %v599
  %1476 = vmatpush1.bf16.msra.mxu0 %v598
  %1477 = vmatprep.subr.bf16.mxu0 %v595
  %1478 = vmatpush1.bf16.msra.mxu0 %v594
  %1479 = vmatprep.subr.bf16.mxu0 0
  %1480 = vmatpush2.bf16.msra.mxu0 0
  %1481 = vmatprep.subr.bf16.mxu0 0
  %1482 = vmatpush2.bf16.msra.mxu0 0
  %1483 = vmatprep.subr.bf16.mxu0 0
  %1484 = vmatpush2.bf16.msra.mxu0 0
  %1485 = vmatprep.subr.bf16.mxu0 0
  %1486 = vmatpush2.bf16.msra.mxu0 0
  %1487 = vmatprep.subr.bf16.mxu0 0
  %1488 = vmatpush2.bf16.msra.mxu0 0
  %1489 = vmatprep.subr.bf16.mxu0 0
  %1490 = vmatpush2.bf16.msra.mxu0 0
  %1491 = vmatprep.subr.bf16.mxu0 0
  %1492 = vmatpush2.bf16.msra.mxu0 0
  %1493 = vmatprep.subr.bf16.mxu0 0
  %1494 = vmatpush2.bf16.msra.mxu0 0
  %1495 = vmatprep.mubr.bf16.mxu0 0
  %1496 = vmatmul.mubr.bf16.gmra.mxu0 %v1457
  %v1497 = vpop.f32.mrf.mxu0
  %v1498 = vadd.f32 0.0, %v1497
  %v1499 = vpop.f32.mrf.mxu0
  %v1500 = vadd.f32 0.0, %v1499
  %v1501 = vpop.f32.mrf.mxu0
  %v1502 = vpop.f32.mrf.mxu0
  %1503 = vdwg.mxu0
  %1504 = vmatprep.subr.bf16.mxu0 %v625
  %1505 = vmatpush1.bf16.msra.mxu0 %v624
  %1506 = vmatprep.subr.bf16.mxu0 %v621
  %1507 = vmatpush1.bf16.msra.mxu0 %v620
  %1508 = vmatprep.subr.bf16.mxu0 %v617
  %1509 = vmatpush1.bf16.msra.mxu0 %v616
  %1510 = vmatprep.subr.bf16.mxu0 %v613
  %1511 = vmatpush1.bf16.msra.mxu0 %v612
  %1512 = vmatprep.subr.bf16.mxu0 %v609
  %1513 = vmatpush1.bf16.msra.mxu0 %v608
  %1514 = vmatprep.subr.bf16.mxu0 %v605
  %1515 = vmatpush1.bf16.msra.mxu0 %v604
  %1516 = vmatprep.subr.bf16.mxu0 %v601
  %1517 = vmatpush1.bf16.msra.mxu0 %v600
  %1518 = vmatprep.subr.bf16.mxu0 %v597
  %1519 = vmatpush1.bf16.msra.mxu0 %v596
  %1520 = vmatprep.subr.bf16.mxu0 0
  %1521 = vmatpush2.bf16.msra.mxu0 0
  %1522 = vmatprep.subr.bf16.mxu0 0
  %1523 = vmatpush2.bf16.msra.mxu0 0
  %1524 = vmatprep.subr.bf16.mxu0 0
  %1525 = vmatpush2.bf16.msra.mxu0 0
  %1526 = vmatprep.subr.bf16.mxu0 0
  %1527 = vmatpush2.bf16.msra.mxu0 0
  %1528 = vmatprep.subr.bf16.mxu0 0
  %1529 = vmatpush2.bf16.msra.mxu0 0
  %1530 = vmatprep.subr.bf16.mxu0 0
  %1531 = vmatpush2.bf16.msra.mxu0 0
  %1532 = vmatprep.subr.bf16.mxu0 0
  %1533 = vmatpush2.bf16.msra.mxu0 0
  %1534 = vmatprep.subr.bf16.mxu0 0
  %1535 = vmatpush2.bf16.msra.mxu0 0
  %1536 = vmatprep.mubr.bf16.mxu0 0
  %1537 = vmatmul.mubr.bf16.gmra.mxu0 %v1457
  %v1538 = vpop.f32.mrf.mxu0
  %v1539 = vadd.f32 0.0, %v1538
  %v1540 = vpop.f32.mrf.mxu0
  %v1541 = vadd.f32 0.0, %v1540
  %v1542 = vpop.f32.mrf.mxu0
  %v1543 = vpop.f32.mrf.mxu0
  %1544 = vdwg.mxu0
  %v1545 = vadd.f32 %v1459, %v1498
  %v1546 = vadd.f32 %v1460, %v1500
  %v1547 = vadd.f32 %v1461, %v1539
  %v1548 = vadd.f32 %v1462, %v1541
  %v1549 = vmul.f32 %v1545, 0.5
  %v1550 = vtanh.pop %v1549
  %v1551 = vadd.f32 %v1550, 1.0
  %v1552 = vmul.f32 %v1551, 0.5
  %v1553 = vmul.f32 %v1546, 0.5
  %v1554 = vtanh.pop %v1553
  %v1555 = vadd.f32 %v1554, 1.0
  %v1556 = vmul.f32 %v1555, 0.5
  %v1557 = vtanh.pop %v1547
  %v1558 = vmul.f32 %v1548, 0.5
  %v1559 = vtanh.pop %v1558
  %v1560 = vadd.f32 %v1559, 1.0
  %v1561 = vmul.f32 %v1560, 0.5
  %v1562 = vld [vmem:[#allocation4] sm:$0xff]
  %v1563 = vmul.f32 %v1556, %v1562
  %v1564 = vmul.f32 %v1552, %v1557
  %v1565 = vadd.f32 %v1563, %v1564
  %1566 = vst [vmem:[#allocation4] sm:$0xff] %v1565
  %v1567 = vtanh.pop %v1565
  %v1568 = vmul.f32 %v1561, %v1567
  %v1569 = vpack.c.bf16 %v1568, %v1568
  %s1570 = scalar_lea.vmem [#allocation3], 32
  %1571 = vst [vmem:[%s1570] sm:$0xf] %v1569
  %v1572 = vld [vmem:[%s765] sm:$0xf]
  %v1573 = vld [vmem:[%s765 + $0x4] sm:$0xf]
  %v1574 = vld [vmem:[%s765 + $0x8] sm:$0xf]
  %v1575 = vld [vmem:[%s765 + $0xc] sm:$0xf]
  %v1576 = vld [vmem:[%s765 + $0x10] sm:$0xf]
  %v1577 = vld [vmem:[%s765 + $0x14] sm:$0xf]
  %v1578 = vld [vmem:[%s765 + $0x18] sm:$0xf]
  %v1579 = vld [vmem:[%s765 + $0x1c] sm:$0xf]
  %v1580 = vld [vmem:[%s4] sm:$0xf]
  %v1581 = vld [vmem:[%s4 + $0x4] sm:$0xf]
  %v1582 = vld [vmem:[%s4 + $0x8] sm:$0xf]
  %v1583 = vld [vmem:[%s4 + $0xc] sm:$0xf]
  %v1584 = vld [vmem:[%s4 + $0x10] sm:$0xf]
  %v1585 = vld [vmem:[%s4 + $0x14] sm:$0xf]
  %v1586 = vld [vmem:[%s4 + $0x18] sm:$0xf]
  %v1587 = vld [vmem:[%s4 + $0x1c] sm:$0xf]
  %v1588 = vld [vmem:[%s4 + $0x20] sm:$0xf]
  %v1589 = vld [vmem:[%s4 + $0x24] sm:$0xf]
  %v1590 = vld [vmem:[%s4 + $0x28] sm:$0xf]
  %v1591 = vld [vmem:[%s4 + $0x2c] sm:$0xf]
  %v1592 = vld [vmem:[%s4 + $0x30] sm:$0xf]
  %v1593 = vld [vmem:[%s4 + $0x34] sm:$0xf]
  %v1594 = vld [vmem:[%s4 + $0x38] sm:$0xf]
  %v1595 = vld [vmem:[%s4 + $0x3c] sm:$0xf]
  %v1596 = vld [vmem:[%s5] sm:$0x1]
  %v1598 = vlaneseq
  %v1599 = vshrl.u32 %v1598, 7
  %v1600 = vsub.s32 0, %v1599
  %v1601 = vrot.slane %v1596, %v1600
  %v1611 = vunpack.c.l.b16 %v1572
  %v1612 = vunpack.c.l.b16 %v1573
  %v1613 = vunpack.c.l.b16 %v1574
  %v1614 = vunpack.c.l.b16 %v1575
  %v1615 = vunpack.c.l.b16 %v1576
  %v1616 = vunpack.c.l.b16 %v1577
  %v1617 = vunpack.c.l.b16 %v1578
  %v1618 = vunpack.c.l.b16 %v1579
  %v1619 = vpack.c.b16 %v1612, %v1611
  %v1620 = vpack.c.b16 %v1614, %v1613
  %v1621 = vpack.c.b16 %v1616, %v1615
  %v1622 = vpack.c.b16 %v1618, %v1617
  %v1643 = vunpack.c.l.b16 %v1580
  %v1644 = vunpack.c.l.b16 %v1581
  %v1645 = vunpack.c.l.b16 %v1582
  %v1646 = vunpack.c.l.b16 %v1583
  %v1647 = vunpack.c.l.b16 %v1584
  %v1648 = vunpack.c.l.b16 %v1585
  %v1649 = vunpack.c.l.b16 %v1586
  %v1650 = vunpack.c.l.b16 %v1587
  %v1651 = vunpack.c.l.b16 %v1588
  %v1652 = vunpack.c.l.b16 %v1589
  %v1653 = vunpack.c.l.b16 %v1590
  %v1654 = vunpack.c.l.b16 %v1591
  %v1655 = vunpack.c.l.b16 %v1592
  %v1656 = vunpack.c.l.b16 %v1593
  %v1657 = vunpack.c.l.b16 %v1594
  %v1658 = vunpack.c.l.b16 %v1595
  %v1659 = vpack.c.b16 %v1644, %v1643
  %v1660 = vpack.c.b16 %v1646, %v1645
  %v1661 = vpack.c.b16 %v1648, %v1647
  %v1662 = vpack.c.b16 %v1650, %v1649
  %v1663 = vpack.c.b16 %v1652, %v1651
  %v1664 = vpack.c.b16 %v1654, %v1653
  %v1665 = vpack.c.b16 %v1656, %v1655
  %v1666 = vpack.c.b16 %v1658, %v1657
  %1675 = vmatprep.subr.bf16.mxu0 0
  %1676 = vmatpush1.bf16.msra.mxu0 %v1666
  %1677 = vmatprep.subr.bf16.mxu0 0
  %1678 = vmatpush1.bf16.msra.mxu0 %v1665
  %1679 = vmatprep.subr.bf16.mxu0 0
  %1680 = vmatpush1.bf16.msra.mxu0 %v1664
  %1681 = vmatprep.subr.bf16.mxu0 0
  %1682 = vmatpush1.bf16.msra.mxu0 %v1663
  %1683 = vmatprep.subr.bf16.mxu0 0
  %1684 = vmatpush1.bf16.msra.mxu0 %v1662
  %1685 = vmatprep.subr.bf16.mxu0 0
  %1686 = vmatpush1.bf16.msra.mxu0 %v1661
  %1687 = vmatprep.subr.bf16.mxu0 0
  %1688 = vmatpush1.bf16.msra.mxu0 %v1660
  %1689 = vmatprep.subr.bf16.mxu0 0
  %1690 = vmatpush1.bf16.msra.mxu0 %v1659
  %1691 = vmatprep.subr.bf16.mxu0 0
  %1692 = vmatpush2.bf16.msra.mxu0 0
  %1693 = vmatprep.subr.bf16.mxu0 0
  %1694 = vmatpush2.bf16.msra.mxu0 0
  %1695 = vmatprep.subr.bf16.mxu0 0
  %1696 = vmatpush2.bf16.msra.mxu0 0
  %1697 = vmatprep.subr.bf16.mxu0 0
  %1698 = vmatpush2.bf16.msra.mxu0 0
  %1699 = vmatprep.subr.bf16.mxu0 0
  %1700 = vmatpush2.bf16.msra.mxu0 0
  %1701 = vmatprep.subr.bf16.mxu0 0
  %1702 = vmatpush2.bf16.msra.mxu0 0
  %1703 = vmatprep.subr.bf16.mxu0 0
  %1704 = vmatpush2.bf16.msra.mxu0 0
  %1705 = vmatprep.subr.bf16.mxu0 0
  %1706 = vmatpush2.bf16.msra.mxu0 0
  %1707 = vmatprep.mubr.bf16.mxu0 0
  %1708 = vmatmul.mubr.bf16.gmra.mxu0 %v1619
  %v1709 = vpop.f32.mrf.mxu0
  %v1710 = vadd.f32 %v1601, %v1709
  %v1711 = vpop.f32.mrf.mxu0
  %v1712 = vpop.f32.mrf.mxu0
  %v1713 = vadd.f32 %v1601, %v1712
  %v1714 = vpop.f32.mrf.mxu0
  %1715 = vmatprep.mubr.bf16.mxu0 0
  %1716 = vmatmul.mubr.bf16.gmra.mxu0 %v1620
  %v1717 = vpop.f32.mrf.mxu0
  %v1718 = vadd.f32 %v1601, %v1717
  %v1719 = vpop.f32.mrf.mxu0
  %v1720 = vpop.f32.mrf.mxu0
  %v1721 = vadd.f32 %v1601, %v1720
  %v1722 = vpop.f32.mrf.mxu0
  %1723 = vmatprep.mubr.bf16.mxu0 0
  %1724 = vmatmul.mubr.bf16.gmra.mxu0 %v1621
  %v1725 = vpop.f32.mrf.mxu0
  %v1726 = vadd.f32 %v1601, %v1725
  %v1727 = vpop.f32.mrf.mxu0
  %v1728 = vpop.f32.mrf.mxu0
  %v1729 = vadd.f32 %v1601, %v1728
  %v1730 = vpop.f32.mrf.mxu0
  %1731 = vmatprep.mubr.bf16.mxu0 0
  %1732 = vmatmul.mubr.bf16.gmra.mxu0 %v1622
  %v1733 = vpop.f32.mrf.mxu0
  %v1734 = vadd.f32 %v1601, %v1733
  %v1735 = vpop.f32.mrf.mxu0
  %v1736 = vpop.f32.mrf.mxu0
  %v1737 = vadd.f32 %v1601, %v1736
  %v1738 = vpop.f32.mrf.mxu0
  %1739 = vdwg.mxu0
  %1740 = vst [vmem:[%s6] sm:$0xff] %v1710
  %1741 = vst [vmem:[%s6 + $0x8] sm:$0xff] %v1713
  %1742 = vst [vmem:[%s6 + $0x10] sm:$0xff] %v1718
  %1743 = vst [vmem:[%s6 + $0x18] sm:$0xff] %v1721
  %1744 = vst [vmem:[%s6 + $0x20] sm:$0xff] %v1726
  %1745 = vst [vmem:[%s6 + $0x28] sm:$0xff] %v1729
  %1746 = vst [vmem:[%s6 + $0x30] sm:$0xff] %v1734
  %1747 = vst [vmem:[%s6 + $0x38] sm:$0xff] %v1737
  // Predicated region
  $region34: #{simple_lstm_forward.1} parent=0 // pred_check
    _
  $region35: #{simple_lstm_forward.1} parent=0 // pred_check_branch
    %1749 = sbr.rel (0) target = $region37
  $region36: #{simple_lstm_forward.1} parent=0 // pred_region
    _
  $region37: #{simple_lstm_forward.1} parent=0 // pred_fallthru
    _
  // Predicated region
  $region38: #{simple_lstm_forward.1} parent=0 // pred_check
    _
  $region39: #{simple_lstm_forward.1} parent=0 // pred_check_branch
    %1751 = sbr.rel (0) target = $region41
  $region40: #{simple_lstm_forward.1} parent=0 // pred_region
    _
  $region41: #{simple_lstm_forward.1} parent=0 // pred_fallthru
    _

</llo_original>
